<compile_context>
chip_gen: v5e
topology: v5e:2x2
jax: 0.10.0
libtpu: 0.0.40
codegen_flags: <defaults>
</compile_context>

<pallas_src>
import jax
import jax.numpy as jnp
from jax.experimental import pallas as pl
from jax.experimental.pallas import tpu as pltpu

BN_EPS = 1e-5


def _round_up(n, m):
    return ((n + m - 1) // m) * m


# ----------------------------------------------------------------------------
# Pallas kernel
# ----------------------------------------------------------------------------
def make_encoder_kernel(num_layers, num_fc1_hidden):
    """Fused forward: fc1 (hidden Linear(+folded BN)+ReLU chain, then Linear+bias)
    followed by (num_layers-1) refinement blocks where the torch concat is
    realised as split matmuls:  relu(x@W_x + var_pred@W_v + b) @ W_f + b_f."""

    def kernel(x_ref, *rest):
        *w_refs, b_ref, out_ref = rest
        w_it = iter(w_refs)
        bias_row = [0]

        def next_bias(width):
            r = bias_row[0]
            bias_row[0] += 1
            return b_ref[r:r + 1, :width]          # (1, width) static slice

        def dot(h_bf16, w_ref):
            return jnp.dot(h_bf16, w_ref[...],
                           preferred_element_type=jnp.float32)

        x_bf = x_ref[...].astype(jnp.bfloat16)      # (TB, IN_PAD)

        # ---- fc1: hidden Linear(+folded BN)+ReLU chain, then Linear+bias ----
        h = x_bf
        for _ in range(num_fc1_hidden):
            w = next(w_it)
            y = dot(h, w) + next_bias(w.shape[1])
            h = jnp.maximum(y, 0.0).astype(jnp.bfloat16)
        w = next(w_it)
        var_pred = dot(h, w) + next_bias(w.shape[1])   # (TB, VAR_PAD) f32
        out_ref[0] = var_pred

        # ---- refinement layers (concat(x, var_pred) -> split matmuls) ----
        # TODO(synk): APPEND_BN branch (BatchNorm1d+ReLU applied to var_pred) not
        # implemented; the module's default config has APPEND_BN=False.
        for l in range(num_layers - 1):
            w_x = next(w_it)
            w_v = next(w_it)
            y = dot(x_bf, w_x) + dot(var_pred.astype(jnp.bfloat16), w_v)
            h = jnp.maximum(y + next_bias(w_v.shape[1]), 0.0).astype(jnp.bfloat16)
            w_f = next(w_it)
            var_pred = dot(h, w_f) + next_bias(w_f.shape[1])
            out_ref[l + 1] = var_pred

    return kernel


# ----------------------------------------------------------------------------
# Parameter packing: fold BN, pad contraction dims to x8, split concat weights,
# pack biases into one array, cast weights to bf16.
# ----------------------------------------------------------------------------
def pack_encoder_params(fc1_blocks, fc1_final, layer_params, input_channels,
                        num_var, weight_dtype=jnp.bfloat16):
    """fc1_blocks:   list of (W(in,out), gamma, beta, mean, var)
       fc1_final:    (W(in,out), bias)
       layer_params: list of ((W(concat_in,out), gamma, beta, mean, var), W_f, b_f)
       Weights are in JAX (in, out) layout (PyTorch (out, in) transposed)."""
    IN_PAD = _round_up(input_channels, 8)
    VAR_PAD = _round_up(num_var, 8)

    def fold(w, g, b, m, v):
        scale = g / jnp.sqrt(v + BN_EPS)
        return w * scale[None, :], b - m * scale

    def pad_mat(w, rows, cols):
        out = jnp.zeros((rows, cols), jnp.float32)
        return out.at[:w.shape[0], :w.shape[1]].set(w.astype(jnp.float32))

    weights, biases = [], []

    c_in_pad = IN_PAD
    for (w, g, b, m, v) in fc1_blocks:
        wf, bf = fold(w, g, b, m, v)
        c_out_pad = _round_up(w.shape[1], 8)
        weights.append(pad_mat(wf, c_in_pad, c_out_pad))
        biases.append(bf)
        c_in_pad = c_out_pad
    w, b = fc1_final
    weights.append(pad_mat(w, c_in_pad, VAR_PAD))
    biases.append(b)

    for (blk, w_fin, b_fin) in layer_params:
        w, g, bb, m, v = blk
        wf, bf = fold(w, g, bb, m, v)
        weights.append(pad_mat(wf[:input_channels], IN_PAD, VAR_PAD))   # W_x
        weights.append(pad_mat(wf[input_channels:], VAR_PAD, VAR_PAD))  # W_v
        biases.append(bf)
        weights.append(pad_mat(w_fin, VAR_PAD, VAR_PAD))
        biases.append(b_fin)

    max_w = max(w.shape[1] for w in weights)
    bias_pack = jnp.zeros((len(biases), max_w), jnp.float32)
    for r, b in enumerate(biases):
        bias_pack = bias_pack.at[r, :b.shape[0]].set(b.astype(jnp.float32))

    weights_cast = [w.astype(weight_dtype) for w in weights]
    meta = dict(IN_PAD=IN_PAD, VAR_PAD=VAR_PAD,
                num_fc1_hidden=len(fc1_blocks),
                num_layers=len(layer_params) + 1,
                input_channels=input_channels, num_var=num_var)
    return weights, weights_cast, bias_pack, meta


# ----------------------------------------------------------------------------
# Wrapper
# ----------------------------------------------------------------------------
def base_encoder_forward(e_param, weights, bias_pack, meta, batch_tile=None):
    B, cin = e_param.shape
    assert cin == meta['input_channels']
    IN_PAD, VAR_PAD = meta['IN_PAD'], meta['VAR_PAD']
    num_layers, num_var = meta['num_layers'], meta['num_var']

    TB = batch_tile or (128 if B >= 128 else 8)
    B_pad = _round_up(B, TB)
    x_pad = jnp.pad(e_param.astype(jnp.float32),
                    ((0, B_pad - B), (0, IN_PAD - cin)))

    grid = (B_pad // TB,)
    in_specs = [pl.BlockSpec((TB, IN_PAD), lambda i: (i, 0))]
    for w in weights:                         # full-array, VMEM-resident blocks
        in_specs.append(pl.BlockSpec(w.shape, lambda i: (0, 0)))
    in_specs.append(pl.BlockSpec(bias_pack.shape, lambda i: (0, 0)))
    out_specs = pl.BlockSpec((num_layers, TB, VAR_PAD), lambda i: (0, i, 0))
    out_shape = jax.ShapeDtypeStruct((num_layers, B_pad, VAR_PAD), jnp.float32)

    flops = sum(2 * B_pad * w.shape[0] * w.shape[1] for w in weights)
    bytes_accessed = (x_pad.size * 4
                      + sum(w.size * w.dtype.itemsize for w in weights)
                      + bias_pack.size * 4
                      + num_layers * B_pad * VAR_PAD * 4)

    out = pl.pallas_call(
        make_encoder_kernel(num_layers, meta['num_fc1_hidden']),
        out_shape=out_shape,
        grid=grid,
        in_specs=in_specs,
        out_specs=out_specs,
        compiler_params=pltpu.CompilerParams(
            dimension_semantics=("parallel",)),
        cost_estimate=pl.CostEstimate(
            flops=flops, transcendentals=0, bytes_accessed=bytes_accessed),
    )(x_pad, *weights, bias_pack)

    batch_dict = {'e_param': e_param}
    for l in range(num_layers):
        batch_dict['var_pred%d' % l] = out[l, :B, :num_var]
    return batch_dict


# ----------------------------------------------------------------------------
# Demo + correctness checks
# ----------------------------------------------------------------------------
if __name__ == "__main__":
    key = jax.random.PRNGKey(0)

    # ----- config (runtime_cfg / model_cfg defaults) -----
    input_channels = 5
    num_edges, num_bound_verts = 16, 8
    fc1_dim = 64
    num_layers = 3
    num_var = num_edges + num_bound_verts       # 24 (no latent, no rotate_angle)
    B = 16                                      # small demo batch -> grid of 2 tiles

    keys = iter(jax.random.split(key, 64))

    def init_linear(k, c_in, c_out):
        return jax.random.normal(k, (c_in, c_out), jnp.float32) / jnp.sqrt(
            jnp.float32(c_in))

    def init_bn(k, c):
        k1, k2, k3, k4 = jax.random.split(k, 4)
        gamma = jax.random.uniform(k1, (c,), jnp.float32, 0.5, 1.5)
        beta = 0.1 * jax.random.normal(k2, (c,), jnp.float32)
        mean = 0.1 * jax.random.normal(k3, (c,), jnp.float32)
        var = jax.random.uniform(k4, (c,), jnp.float32, 0.5, 1.5)
        return gamma, beta, mean, var

    # fc1: 5 -> 64 -> 128 -> 256 -> 24 (Linear+BN+ReLU), then Linear(24->24)+bias
    fc1_dims = [input_channels, fc1_dim, fc1_dim * 2, fc1_dim * 4, num_var]
    fc1_blocks = []
    for k in range(4):
        w = init_linear(next(keys), fc1_dims[k], fc1_dims[k + 1])
        fc1_blocks.append((w,) + init_bn(next(keys), fc1_dims[k + 1]))
    fc1_final = (init_linear(next(keys), num_var, num_var),
                 0.1 * jax.random.normal(next(keys), (num_var,), jnp.float32))

    # fc_layers[i]: Linear(5+24 -> 24)+BN+ReLU, then Linear(24->24)+bias
    layer_params = []
    for _ in range(num_layers - 1):
        w = init_linear(next(keys), input_channels + num_var, num_var)
        bn = init_bn(next(keys), num_var)
        fw = init_linear(next(keys), num_var, num_var)
        fb = 0.1 * jax.random.normal(next(keys), (num_var,), jnp.float32)
        layer_params.append(((w,) + bn, fw, fb))

    weights_f32, weights_bf16, bias_pack, meta = pack_encoder_params(
        fc1_blocks, fc1_final, layer_params, input_channels, num_var)

    e_param = jax.random.normal(jax.random.PRNGKey(1), (B, input_channels),
                                jnp.float32)

    # ----- run kernel -----
    batch_dict = base_encoder_forward(e_param, weights_bf16, bias_pack, meta)
    batch_dict = jax.block_until_ready(batch_dict)

    # ----- references -----
    HIGH = jax.lax.Precision.HIGHEST

    def module_ref(x):
        """Pure-JAX mirror of the PyTorch module (BN eval mode, f32)."""
        def mlp(h, blocks, fw, fb):
            for (w, g, b, m, v) in blocks:
                y = jnp.dot(h, w, precision=HIGH)
                h = jnp.maximum((y - m) / jnp.sqrt(v + BN_EPS) * g + b, 0.0)
            return jnp.dot(h, fw, precision=HIGH) + fb
        var_pred = mlp(x, fc1_blocks, *fc1_final)
        outs = [var_pred]
        for (blk, fw, fb) in layer_params:
            li = jnp.concatenate([x, var_pred], axis=1)
            var_pred = mlp(li, [blk], fw, fb)
            outs.append(var_pred)
        return outs

    def packed_ref(x_p, weights, op_dtype, precision):
        """Mirrors exactly what the kernel computes from the packed params."""
        def dot(a, b):
            return jnp.dot(a.astype(op_dtype), b.astype(op_dtype),
                           preferred_element_type=jnp.float32,
                           precision=precision)
        wi = iter(weights)
        row = [0]
        def bias(width):
            r = row[0]; row[0] += 1
            return bias_pack[r:r + 1, :width]
        h = x_p
        for _ in range(meta['num_fc1_hidden']):
            w = next(wi)
            h = jnp.maximum(dot(h, w) + bias(w.shape[1]), 0.0)
        w = next(wi)
        var_pred = dot(h, w) + bias(w.shape[1])
        outs = [var_pred]
        for _ in range(num_layers - 1):
            w_x = next(wi); w_v = next(wi)
            y = dot(x_p, w_x) + dot(var_pred, w_v)
            h = jnp.maximum(y + bias(w_v.shape[1]), 0.0)
            w_f = next(wi)
            var_pred = dot(h, w_f) + bias(w_f.shape[1])
            outs.append(var_pred)
        return outs

    x_pad = jnp.pad(e_param, ((0, 0), (0, meta['IN_PAD'] - input_channels)))

    # (a) BN-fold / concat-split / padding preserves module semantics (f32, tight).
    ref_mod = module_ref(e_param)
    ref_fold = packed_ref(x_pad, weights_f32, jnp.float32, HIGH)
    for rm, rf in zip(ref_mod, ref_fold):
        err = float(jnp.max(jnp.abs(rf[:, :num_var] - rm)))
        assert err < 1e-4, f"BN-fold/split mismatch: max abs err {err}"

    # (b) Kernel matches the bf16-weight packed reference.
    ref_bf16 = packed_ref(x_pad, weights_bf16, jnp.bfloat16, None)
    for l in range(num_layers):
        got = batch_dict['var_pred%d' % l]
        assert got.shape == (B, num_var), (got.shape, (B, num_var))
        ref = ref_bf16[l][:, :num_var]
        err = float(jnp.max(jnp.abs(got - ref)))
        assert err < 5e-3, f"var_pred{l} mismatch vs bf16 packed ref: {err}"

    print("KERNEL_OK")
</pallas_src>

<mosaic_0001>
module attributes {stable_mosaic.version = 11 : i64} {
  func.func @kernel(%arg0: i32, %arg1: memref<8x8xf32, #tpu.memory_space<vmem>>, %arg2: memref<8x64xbf16, #tpu.memory_space<vmem>>, %arg3: memref<64x128xbf16, #tpu.memory_space<vmem>>, %arg4: memref<128x256xbf16, #tpu.memory_space<vmem>>, %arg5: memref<256x24xbf16, #tpu.memory_space<vmem>>, %arg6: memref<24x24xbf16, #tpu.memory_space<vmem>>, %arg7: memref<8x24xbf16, #tpu.memory_space<vmem>>, %arg8: memref<24x24xbf16, #tpu.memory_space<vmem>>, %arg9: memref<24x24xbf16, #tpu.memory_space<vmem>>, %arg10: memref<8x24xbf16, #tpu.memory_space<vmem>>, %arg11: memref<24x24xbf16, #tpu.memory_space<vmem>>, %arg12: memref<24x24xbf16, #tpu.memory_space<vmem>>, %arg13: memref<9x256xf32, #tpu.memory_space<vmem>>, %arg14: memref<3x8x24xf32, #tpu.memory_space<vmem>>) attributes {dimension_semantics = [#tpu.dimension_semantics<parallel>], iteration_bounds = array<i64: 2>, scalar_prefetch = 0 : i64, scratch_operands = 0 : i64, tpu.core_type = #tpu.core_type<tc>, window_params = [{transform_indices = @transform_0, window_bounds = array<i64: 8, 8>}, {pipeline_mode = #tpu.pipeline_mode<synchronous>, transform_indices = @transform_1, window_bounds = array<i64: 8, 64>}, {pipeline_mode = #tpu.pipeline_mode<synchronous>, transform_indices = @transform_2, window_bounds = array<i64: 64, 128>}, {pipeline_mode = #tpu.pipeline_mode<synchronous>, transform_indices = @transform_3, window_bounds = array<i64: 128, 256>}, {pipeline_mode = #tpu.pipeline_mode<synchronous>, transform_indices = @transform_4, window_bounds = array<i64: 256, 24>}, {pipeline_mode = #tpu.pipeline_mode<synchronous>, transform_indices = @transform_5, window_bounds = array<i64: 24, 24>}, {pipeline_mode = #tpu.pipeline_mode<synchronous>, transform_indices = @transform_6, window_bounds = array<i64: 8, 24>}, {pipeline_mode = #tpu.pipeline_mode<synchronous>, transform_indices = @transform_7, window_bounds = array<i64: 24, 24>}, {pipeline_mode = #tpu.pipeline_mode<synchronous>, transform_indices = @transform_8, window_bounds = array<i64: 24, 24>}, {pipeline_mode = #tpu.pipeline_mode<synchronous>, transform_indices = @transform_9, window_bounds = array<i64: 8, 24>}, {pipeline_mode = #tpu.pipeline_mode<synchronous>, transform_indices = @transform_10, window_bounds = array<i64: 24, 24>}, {pipeline_mode = #tpu.pipeline_mode<synchronous>, transform_indices = @transform_11, window_bounds = array<i64: 24, 24>}, {pipeline_mode = #tpu.pipeline_mode<synchronous>, transform_indices = @transform_12, window_bounds = array<i64: 9, 256>}, {transform_indices = @transform_13, window_bounds = array<i64: 3, 8, 24>}]} {
    %c0 = arith.constant 0 : index
    %c0_0 = arith.constant 0 : index
    %0 = vector.load %arg1[%c0, %c0_0] : memref<8x8xf32, #tpu.memory_space<vmem>>, vector<8x8xf32>
    %1 = arith.truncf %0 : vector<8x8xf32> to vector<8x8xbf16>
    %c0_1 = arith.constant 0 : index
    %c0_2 = arith.constant 0 : index
    %2 = vector.load %arg2[%c0_1, %c0_2] : memref<8x64xbf16, #tpu.memory_space<vmem>>, vector<8x64xbf16>
    %cst = arith.constant dense<0.000000e+00> : vector<8x64xf32>
    %3 = tpu.matmul %1, %2, %cst {dimension_numbers = #tpu.dot_dimension_numbers<[1], [0], [0], [1], [0, 0, 1, 1], [], []>} : vector<8x8xbf16>, vector<8x64xbf16>, vector<8x64xf32> -> vector<8x64xf32>
    %c0_3 = arith.constant 0 : index
    %c0_4 = arith.constant 0 : index
    %4 = vector.load %arg13[%c0_3, %c0_4] : memref<9x256xf32, #tpu.memory_space<vmem>>, vector<1x64xf32>
    %5 = vector.broadcast %4 : vector<1x64xf32> to vector<8x64xf32>
    %6 = arith.addf %3, %5 : vector<8x64xf32>
    %cst_5 = arith.constant 0.000000e+00 : f32
    %7 = vector.broadcast %cst_5 : f32 to vector<8x64xf32>
    %8 = arith.maximumf %6, %7 : vector<8x64xf32>
    %9 = arith.truncf %8 : vector<8x64xf32> to vector<8x64xbf16>
    %c0_6 = arith.constant 0 : index
    %c0_7 = arith.constant 0 : index
    %10 = vector.load %arg3[%c0_6, %c0_7] : memref<64x128xbf16, #tpu.memory_space<vmem>>, vector<64x128xbf16>
    %cst_8 = arith.constant dense<0.000000e+00> : vector<8x128xf32>
    %11 = tpu.matmul %9, %10, %cst_8 {dimension_numbers = #tpu.dot_dimension_numbers<[1], [0], [0], [1], [0, 0, 1, 1], [], []>} : vector<8x64xbf16>, vector<64x128xbf16>, vector<8x128xf32> -> vector<8x128xf32>
    %c1 = arith.constant 1 : index
    %c0_9 = arith.constant 0 : index
    %12 = vector.load %arg13[%c1, %c0_9] : memref<9x256xf32, #tpu.memory_space<vmem>>, vector<1x128xf32>
    %13 = vector.broadcast %12 : vector<1x128xf32> to vector<8x128xf32>
    %14 = arith.addf %11, %13 : vector<8x128xf32>
    %cst_10 = arith.constant 0.000000e+00 : f32
    %15 = vector.broadcast %cst_10 : f32 to vector<8x128xf32>
    %16 = arith.maximumf %14, %15 : vector<8x128xf32>
    %17 = arith.truncf %16 : vector<8x128xf32> to vector<8x128xbf16>
    %c0_11 = arith.constant 0 : index
    %c0_12 = arith.constant 0 : index
    %18 = vector.load %arg4[%c0_11, %c0_12] : memref<128x256xbf16, #tpu.memory_space<vmem>>, vector<128x256xbf16>
    %cst_13 = arith.constant dense<0.000000e+00> : vector<8x256xf32>
    %19 = tpu.matmul %17, %18, %cst_13 {dimension_numbers = #tpu.dot_dimension_numbers<[1], [0], [0], [1], [0, 0, 1, 1], [], []>} : vector<8x128xbf16>, vector<128x256xbf16>, vector<8x256xf32> -> vector<8x256xf32>
    %c2 = arith.constant 2 : index
    %c0_14 = arith.constant 0 : index
    %20 = vector.load %arg13[%c2, %c0_14] : memref<9x256xf32, #tpu.memory_space<vmem>>, vector<1x256xf32>
    %21 = vector.broadcast %20 : vector<1x256xf32> to vector<8x256xf32>
    %22 = arith.addf %19, %21 : vector<8x256xf32>
    %cst_15 = arith.constant 0.000000e+00 : f32
    %23 = vector.broadcast %cst_15 : f32 to vector<8x256xf32>
    %24 = arith.maximumf %22, %23 : vector<8x256xf32>
    %25 = arith.truncf %24 : vector<8x256xf32> to vector<8x256xbf16>
    %c0_16 = arith.constant 0 : index
    %c0_17 = arith.constant 0 : index
    %26 = vector.load %arg5[%c0_16, %c0_17] : memref<256x24xbf16, #tpu.memory_space<vmem>>, vector<256x24xbf16>
    %cst_18 = arith.constant dense<0.000000e+00> : vector<8x24xf32>
    %27 = tpu.matmul %25, %26, %cst_18 {dimension_numbers = #tpu.dot_dimension_numbers<[1], [0], [0], [1], [0, 0, 1, 1], [], []>} : vector<8x256xbf16>, vector<256x24xbf16>, vector<8x24xf32> -> vector<8x24xf32>
    %c3 = arith.constant 3 : index
    %c0_19 = arith.constant 0 : index
    %28 = vector.load %arg13[%c3, %c0_19] : memref<9x256xf32, #tpu.memory_space<vmem>>, vector<1x24xf32>
    %29 = vector.broadcast %28 : vector<1x24xf32> to vector<8x24xf32>
    %30 = arith.addf %27, %29 : vector<8x24xf32>
    %cst_20 = arith.constant 0.000000e+00 : f32
    %31 = vector.broadcast %cst_20 : f32 to vector<8x24xf32>
    %32 = arith.maximumf %30, %31 : vector<8x24xf32>
    %33 = arith.truncf %32 : vector<8x24xf32> to vector<8x24xbf16>
    %c0_21 = arith.constant 0 : index
    %c0_22 = arith.constant 0 : index
    %34 = vector.load %arg6[%c0_21, %c0_22] : memref<24x24xbf16, #tpu.memory_space<vmem>>, vector<24x24xbf16>
    %cst_23 = arith.constant dense<0.000000e+00> : vector<8x24xf32>
    %35 = tpu.matmul %33, %34, %cst_23 {dimension_numbers = #tpu.dot_dimension_numbers<[1], [0], [0], [1], [0, 0, 1, 1], [], []>} : vector<8x24xbf16>, vector<24x24xbf16>, vector<8x24xf32> -> vector<8x24xf32>
    %c4 = arith.constant 4 : index
    %c0_24 = arith.constant 0 : index
    %36 = vector.load %arg13[%c4, %c0_24] : memref<9x256xf32, #tpu.memory_space<vmem>>, vector<1x24xf32>
    %37 = vector.broadcast %36 : vector<1x24xf32> to vector<8x24xf32>
    %38 = arith.addf %35, %37 : vector<8x24xf32>
    %c0_25 = arith.constant 0 : index
    %c0_26 = arith.constant 0 : index
    %c0_27 = arith.constant 0 : index
    %39 = vector.load %arg14[%c0_25, %c0_26, %c0_27] : memref<3x8x24xf32, #tpu.memory_space<vmem>>, vector<1x8x24xf32>
    %40 = vector.shape_cast %39 : vector<1x8x24xf32> to vector<8x24xf32>
    %41 = vector.shape_cast %38 : vector<8x24xf32> to vector<1x8x24xf32>
    tpu.vector_store %arg14[%c0_25, %c0_26, %c0_27], %41 {strides = array<i32>} : memref<3x8x24xf32, #tpu.memory_space<vmem>>, vector<1x8x24xf32>,
    %c0_28 = arith.constant 0 : index
    %c0_29 = arith.constant 0 : index
    %42 = vector.load %arg7[%c0_28, %c0_29] : memref<8x24xbf16, #tpu.memory_space<vmem>>, vector<8x24xbf16>
    %cst_30 = arith.constant dense<0.000000e+00> : vector<8x24xf32>
    %43 = tpu.matmul %1, %42, %cst_30 {dimension_numbers = #tpu.dot_dimension_numbers<[1], [0], [0], [1], [0, 0, 1, 1], [], []>} : vector<8x8xbf16>, vector<8x24xbf16>, vector<8x24xf32> -> vector<8x24xf32>
    %44 = arith.truncf %38 : vector<8x24xf32> to vector<8x24xbf16>
    %c0_31 = arith.constant 0 : index
    %c0_32 = arith.constant 0 : index
    %45 = vector.load %arg8[%c0_31, %c0_32] : memref<24x24xbf16, #tpu.memory_space<vmem>>, vector<24x24xbf16>
    %cst_33 = arith.constant dense<0.000000e+00> : vector<8x24xf32>
    %46 = tpu.matmul %44, %45, %cst_33 {dimension_numbers = #tpu.dot_dimension_numbers<[1], [0], [0], [1], [0, 0, 1, 1], [], []>} : vector<8x24xbf16>, vector<24x24xbf16>, vector<8x24xf32> -> vector<8x24xf32>
    %47 = arith.addf %43, %46 : vector<8x24xf32>
    %c5 = arith.constant 5 : index
    %c0_34 = arith.constant 0 : index
    %48 = vector.load %arg13[%c5, %c0_34] : memref<9x256xf32, #tpu.memory_space<vmem>>, vector<1x24xf32>
    %49 = vector.broadcast %48 : vector<1x24xf32> to vector<8x24xf32>
    %50 = arith.addf %47, %49 : vector<8x24xf32>
    %cst_35 = arith.constant 0.000000e+00 : f32
    %51 = vector.broadcast %cst_35 : f32 to vector<8x24xf32>
    %52 = arith.maximumf %50, %51 : vector<8x24xf32>
    %53 = arith.truncf %52 : vector<8x24xf32> to vector<8x24xbf16>
    %c0_36 = arith.constant 0 : index
    %c0_37 = arith.constant 0 : index
    %54 = vector.load %arg9[%c0_36, %c0_37] : memref<24x24xbf16, #tpu.memory_space<vmem>>, vector<24x24xbf16>
    %cst_38 = arith.constant dense<0.000000e+00> : vector<8x24xf32>
    %55 = tpu.matmul %53, %54, %cst_38 {dimension_numbers = #tpu.dot_dimension_numbers<[1], [0], [0], [1], [0, 0, 1, 1], [], []>} : vector<8x24xbf16>, vector<24x24xbf16>, vector<8x24xf32> -> vector<8x24xf32>
    %c6 = arith.constant 6 : index
    %c0_39 = arith.constant 0 : index
    %56 = vector.load %arg13[%c6, %c0_39] : memref<9x256xf32, #tpu.memory_space<vmem>>, vector<1x24xf32>
    %57 = vector.broadcast %56 : vector<1x24xf32> to vector<8x24xf32>
    %58 = arith.addf %55, %57 : vector<8x24xf32>
    %c1_40 = arith.constant 1 : index
    %c0_41 = arith.constant 0 : index
    %c0_42 = arith.constant 0 : index
    %59 = vector.load %arg14[%c1_40, %c0_41, %c0_42] : memref<3x8x24xf32, #tpu.memory_space<vmem>>, vector<1x8x24xf32>
    %60 = vector.shape_cast %59 : vector<1x8x24xf32> to vector<8x24xf32>
    %61 = vector.shape_cast %58 : vector<8x24xf32> to vector<1x8x24xf32>
    tpu.vector_store %arg14[%c1_40, %c0_41, %c0_42], %61 {strides = array<i32>} : memref<3x8x24xf32, #tpu.memory_space<vmem>>, vector<1x8x24xf32>,
    %c0_43 = arith.constant 0 : index
    %c0_44 = arith.constant 0 : index
    %62 = vector.load %arg10[%c0_43, %c0_44] : memref<8x24xbf16, #tpu.memory_space<vmem>>, vector<8x24xbf16>
    %cst_45 = arith.constant dense<0.000000e+00> : vector<8x24xf32>
    %63 = tpu.matmul %1, %62, %cst_45 {dimension_numbers = #tpu.dot_dimension_numbers<[1], [0], [0], [1], [0, 0, 1, 1], [], []>} : vector<8x8xbf16>, vector<8x24xbf16>, vector<8x24xf32> -> vector<8x24xf32>
    %64 = arith.truncf %58 : vector<8x24xf32> to vector<8x24xbf16>
    %c0_46 = arith.constant 0 : index
    %c0_47 = arith.constant 0 : index
    %65 = vector.load %arg11[%c0_46, %c0_47] : memref<24x24xbf16, #tpu.memory_space<vmem>>, vector<24x24xbf16>
    %cst_48 = arith.constant dense<0.000000e+00> : vector<8x24xf32>
    %66 = tpu.matmul %64, %65, %cst_48 {dimension_numbers = #tpu.dot_dimension_numbers<[1], [0], [0], [1], [0, 0, 1, 1], [], []>} : vector<8x24xbf16>, vector<24x24xbf16>, vector<8x24xf32> -> vector<8x24xf32>
    %67 = arith.addf %63, %66 : vector<8x24xf32>
    %c7 = arith.constant 7 : index
    %c0_49 = arith.constant 0 : index
    %68 = vector.load %arg13[%c7, %c0_49] : memref<9x256xf32, #tpu.memory_space<vmem>>, vector<1x24xf32>
    %69 = vector.broadcast %68 : vector<1x24xf32> to vector<8x24xf32>
    %70 = arith.addf %67, %69 : vector<8x24xf32>
    %cst_50 = arith.constant 0.000000e+00 : f32
    %71 = vector.broadcast %cst_50 : f32 to vector<8x24xf32>
    %72 = arith.maximumf %70, %71 : vector<8x24xf32>
    %73 = arith.truncf %72 : vector<8x24xf32> to vector<8x24xbf16>
    %c0_51 = arith.constant 0 : index
    %c0_52 = arith.constant 0 : index
    %74 = vector.load %arg12[%c0_51, %c0_52] : memref<24x24xbf16, #tpu.memory_space<vmem>>, vector<24x24xbf16>
    %cst_53 = arith.constant dense<0.000000e+00> : vector<8x24xf32>
    %75 = tpu.matmul %73, %74, %cst_53 {dimension_numbers = #tpu.dot_dimension_numbers<[1], [0], [0], [1], [0, 0, 1, 1], [], []>} : vector<8x24xbf16>, vector<24x24xbf16>, vector<8x24xf32> -> vector<8x24xf32>
    %c8 = arith.constant 8 : index
    %c0_54 = arith.constant 0 : index
    %76 = vector.load %arg13[%c8, %c0_54] : memref<9x256xf32, #tpu.memory_space<vmem>>, vector<1x24xf32>
    %77 = vector.broadcast %76 : vector<1x24xf32> to vector<8x24xf32>
    %78 = arith.addf %75, %77 : vector<8x24xf32>
    %c2_55 = arith.constant 2 : index
    %c0_56 = arith.constant 0 : index
    %c0_57 = arith.constant 0 : index
    %79 = vector.load %arg14[%c2_55, %c0_56, %c0_57] : memref<3x8x24xf32, #tpu.memory_space<vmem>>, vector<1x8x24xf32>
    %80 = vector.shape_cast %79 : vector<1x8x24xf32> to vector<8x24xf32>
    %81 = vector.shape_cast %78 : vector<8x24xf32> to vector<1x8x24xf32>
    tpu.vector_store %arg14[%c2_55, %c0_56, %c0_57], %81 {strides = array<i32>} : memref<3x8x24xf32, #tpu.memory_space<vmem>>, vector<1x8x24xf32>,
    return
  }
  func.func @transform_0(%arg0: i32) -> (i32, i32) {
    %c0_i32 = arith.constant 0 : i32
    %c0_i32_0 = arith.constant 0 : i32
    return %arg0, %c0_i32 : i32, i32
  }
  func.func @transform_1(%arg0: i32) -> (i32, i32) {
    %c0_i32 = arith.constant 0 : i32
    %c0_i32_0 = arith.constant 0 : i32
    %c0_i32_1 = arith.constant 0 : i32
    return %c0_i32, %c0_i32_0 : i32, i32
  }
  func.func @transform_2(%arg0: i32) -> (i32, i32) {
    %c0_i32 = arith.constant 0 : i32
    %c0_i32_0 = arith.constant 0 : i32
    %c0_i32_1 = arith.constant 0 : i32
    return %c0_i32, %c0_i32_0 : i32, i32
  }
  func.func @transform_3(%arg0: i32) -> (i32, i32) {
    %c0_i32 = arith.constant 0 : i32
    %c0_i32_0 = arith.constant 0 : i32
    %c0_i32_1 = arith.constant 0 : i32
    return %c0_i32, %c0_i32_0 : i32, i32
  }
  func.func @transform_4(%arg0: i32) -> (i32, i32) {
    %c0_i32 = arith.constant 0 : i32
    %c0_i32_0 = arith.constant 0 : i32
    %c0_i32_1 = arith.constant 0 : i32
    return %c0_i32, %c0_i32_0 : i32, i32
  }
  func.func @transform_5(%arg0: i32) -> (i32, i32) {
    %c0_i32 = arith.constant 0 : i32
    %c0_i32_0 = arith.constant 0 : i32
    %c0_i32_1 = arith.constant 0 : i32
    return %c0_i32, %c0_i32_0 : i32, i32
  }
  func.func @transform_6(%arg0: i32) -> (i32, i32) {
    %c0_i32 = arith.constant 0 : i32
    %c0_i32_0 = arith.constant 0 : i32
    %c0_i32_1 = arith.constant 0 : i32
    return %c0_i32, %c0_i32_0 : i32, i32
  }
  func.func @transform_7(%arg0: i32) -> (i32, i32) {
    %c0_i32 = arith.constant 0 : i32
    %c0_i32_0 = arith.constant 0 : i32
    %c0_i32_1 = arith.constant 0 : i32
    return %c0_i32, %c0_i32_0 : i32, i32
  }
  func.func @transform_8(%arg0: i32) -> (i32, i32) {
    %c0_i32 = arith.constant 0 : i32
    %c0_i32_0 = arith.constant 0 : i32
    %c0_i32_1 = arith.constant 0 : i32
    return %c0_i32, %c0_i32_0 : i32, i32
  }
  func.func @transform_9(%arg0: i32) -> (i32, i32) {
    %c0_i32 = arith.constant 0 : i32
    %c0_i32_0 = arith.constant 0 : i32
    %c0_i32_1 = arith.constant 0 : i32
    return %c0_i32, %c0_i32_0 : i32, i32
  }
  func.func @transform_10(%arg0: i32) -> (i32, i32) {
    %c0_i32 = arith.constant 0 : i32
    %c0_i32_0 = arith.constant 0 : i32
    %c0_i32_1 = arith.constant 0 : i32
    return %c0_i32, %c0_i32_0 : i32, i32
  }
  func.func @transform_11(%arg0: i32) -> (i32, i32) {
    %c0_i32 = arith.constant 0 : i32
    %c0_i32_0 = arith.constant 0 : i32
    %c0_i32_1 = arith.constant 0 : i32
    return %c0_i32, %c0_i32_0 : i32, i32
  }
  func.func @transform_12(%arg0: i32) -> (i32, i32) {
    %c0_i32 = arith.constant 0 : i32
    %c0_i32_0 = arith.constant 0 : i32
    %c0_i32_1 = arith.constant 0 : i32
    return %c0_i32, %c0_i32_0 : i32, i32
  }
  func.func @transform_13(%arg0: i32) -> (i32, i32, i32) {
    %c0_i32 = arith.constant 0 : i32
    %c0_i32_0 = arith.constant 0 : i32
    %c0_i32_1 = arith.constant 0 : i32
    return %c0_i32, %arg0, %c0_i32_0 : i32, i32, i32
  }
}

</mosaic_0001>

<llo_original>
// kernel: tpu_custom_call.1
$region0: #{tpu_custom_call.1}
  #allocation0 [shape = 'u32[]', space=smem, size = 0x4, offset = 0x4, fixed_abs, tag = 'smem constant byte address 0x4 - core index']
  #allocation1 [shape = 'u32[72,128]{1,0:T(1,128)}', space=vmem, size = 0x9000, scoped, tag = 'internal scratch']
  %s0 = inlined_call_operand.vmem [shape: f32[16,8], index: 0, kind: input, shape index: {}]
  %s1 = inlined_call_operand.hbm [shape: bf16[8,64], index: 1, kind: input, shape index: {}]
  %s2 = inlined_call_operand.vmem [shape: bf16[64,128], index: 2, kind: input, shape index: {}]
  %s3 = inlined_call_operand.vmem [shape: bf16[128,256], index: 3, kind: input, shape index: {}]
  %s4 = inlined_call_operand.vmem [shape: bf16[256,24], index: 4, kind: input, shape index: {}]
  %s5 = inlined_call_operand.vmem [shape: bf16[24,24], index: 5, kind: input, shape index: {}]
  %s6 = inlined_call_operand.hbm [shape: bf16[8,24], index: 6, kind: input, shape index: {}]
  %s7 = inlined_call_operand.hbm [shape: bf16[24,24], index: 7, kind: input, shape index: {}]
  %s8 = inlined_call_operand.hbm [shape: bf16[24,24], index: 8, kind: input, shape index: {}]
  %s9 = inlined_call_operand.hbm [shape: bf16[8,24], index: 9, kind: input, shape index: {}]
  %s10 = inlined_call_operand.vmem [shape: bf16[24,24], index: 10, kind: input, shape index: {}]
  %s11 = inlined_call_operand.hbm [shape: bf16[24,24], index: 11, kind: input, shape index: {}]
  %s12 = inlined_call_operand.hbm [shape: f32[9,256], index: 12, kind: input, shape index: {}]
  %s13 = inlined_call_operand.hbm [shape: f32[3,16,24], index: 13, kind: output, shape index: {}]
  %s14 = sld [smem:[#allocation0]]
  $region113: #{tpu_custom_call.1} parent=0
    _
  %s16 = ssub.s32 1, %s14
  %s17 = scalar_select 0, %s16, %s14
  $region1: #{tpu_custom_call.1} parent=0
    #allocation2 [shape = 'u8[2048]{0}', space=vmem, size = 0x800, scoped, tag = 'input window, operand 1, single buffered']
    #allocation3 [shape = 's32[2]{0}', space=sflag, size = 0x8, scoped, tag = 'scoped memory for tpu_custom_call.1']
    #allocation4 [shape = 's32[2]{0}', space=sflag, size = 0x8, scoped, tag = 'scoped memory for tpu_custom_call.1']
    #allocation5 [shape = 'u8[2048]{0}', space=vmem, size = 0x800, scoped, tag = 'input window, operand 6, single buffered']
    #allocation6 [shape = 's32[1]{0}', space=sflag, size = 0x4, scoped, tag = 'scoped memory for tpu_custom_call.1']
    #allocation7 [shape = 'u8[6144]{0}', space=vmem, size = 0x1800, scoped, tag = 'input window, operand 7, single buffered']
    #allocation8 [shape = 'u8[6144]{0}', space=vmem, size = 0x1800, scoped, tag = 'input window, operand 8, single buffered']
    #allocation9 [shape = 's32[1]{0}', space=sflag, size = 0x4, scoped, tag = 'scoped memory for tpu_custom_call.1']
    #allocation10 [shape = 'u8[2048]{0}', space=vmem, size = 0x800, scoped, tag = 'input window, operand 9, single buffered']
    #allocation11 [shape = 'u8[6144]{0}', space=vmem, size = 0x1800, scoped, tag = 'input window, operand 11, single buffered']
    #allocation12 [shape = 's32[1]{0}', space=sflag, size = 0x4, scoped, tag = 'scoped memory for tpu_custom_call.1']
    #allocation13 [shape = 'u8[16384]{0}', space=vmem, size = 0x4000, scoped, tag = 'input window, operand 12, single buffered']
    #allocation14 [shape = 'u8[24576]{0}', space=vmem, size = 0x6000, scoped, tag = 'output window, operand 0']
    %18 = vsyncpa [#allocation3], 0
    %19 = vsyncpa [#allocation6], 0
    %20 = vsyncpa [#allocation9], 0
    %21 = vsyncpa [#allocation12], 0
    %22 = vsyncpa [#allocation4], 0
    %s23 = scalar_lea.sflag [#allocation4], 1
    %24 = vsyncpa %s23, 0
    loop: start=0, step=1, limit=4
    $region2: #{tpu_custom_call.1} parent=1 // loop_pre_header
      _
    $region3: #{tpu_custom_call.1} parent=1 // loop_header
      %s26 = sphi 0, %s30
      %p27 = scmp.ge.s32.totalorder %s26, 4
      %s36 = sphi 0, %s38
      %s39 = sphi 0, %s36
      %s40 = sphi 0, %s39
      %s56 = sphi 0, %s40
      %s60 = sphi 0, %s60
      %s62 = sphi 0, %s60
      %s63 = sphi 0, %s62
      %s77 = sphi 0, %s63
      %s81 = sphi 0, %s81
      %s83 = sphi 0, %s81
      %s84 = sphi 0, %s83
      %s98 = sphi 0, %s84
      %s102 = sphi 0, %s102
      %s104 = sphi 0, %s102
      %s105 = sphi 0, %s104
      %s119 = sphi 0, %s105
      %s123 = sphi 0, %s123
      %s125 = sphi 0, %s123
      %s126 = sphi 0, %s125
      %s140 = sphi 0, %s126
      %s144 = sphi 0, %s144
      %s146 = sphi 0, %s144
      %s147 = sphi 0, %s146
      %s161 = sphi 0, %s147
      %s165 = sphi 0, %s165
      %s167 = sphi 0, %s165
      %s168 = sphi 0, %s167
      %s182 = sphi 0, %s168
      %s186 = sphi 0, %s186
      %s188 = sphi 0, %s186
      %s189 = sphi 0, %s188
      %s203 = sphi 0, %s189
      %s207 = sphi 0, %s207
      %s209 = sphi 0, %s207
      %s210 = sphi 0, %s209
      %s224 = sphi 0, %s210
      %s228 = sphi 0, %s228
      %s230 = sphi 0, %s228
      %s231 = sphi 0, %s230
      %s245 = sphi 0, %s231
      %s249 = sphi 0, %s249
      %s251 = sphi 0, %s249
      %s252 = sphi 0, %s251
      %s266 = sphi 0, %s252
      %s270 = sphi 0, %s270
      %s272 = sphi 0, %s270
      %s273 = sphi 0, %s272
      %s287 = sphi 0, %s273
      %s291 = sphi 0, %s291
      %s293 = sphi 0, %s291
      %s294 = sphi 0, %s293
      %s308 = sphi 0, %s294
      %s314 = sphi 0, %s316
      %s317 = sphi 0, %s314
      %s318 = sphi 0, %s317
      %s334 = sphi 0, %s318
    $region4: #{tpu_custom_call.1} parent=1 // loop_header_branch
      %29 = sbr.rel (%p27) target = $region8
    $region5: #{tpu_custom_call.1} parent=1 // loop_body
      %s31 = ssub.s32 %s26, 1
      %s32 = ssub.s32 %s26, 2
      %s33 = sadd.s32 %s26, 1
      %s34 = ssub.s32 %s26, %s33
      %p35 = scmp.eq.s32.totalorder %s34, 0
      %s37 = sadd.s32 %s36, 1
      %s38 = scalar_select %p35, %s36, %s37
      %p41 = pneg %p35
      %p42 = scmp.eq.s32.totalorder %s26, 1
      %p43 = por %p41, %p42
      %p44 = scmp.ne.s32.totalorder %s36, %s39
      %p45 = scmp.eq.s32.totalorder %s26, 0
      %p46 = por %p44, %p45
      %p47 = scmp.ne.s32.totalorder %s36, %s39
      %p48 = scmp.eq.s32.totalorder %s31, 1
      %p49 = por %p47, %p48
      %p50 = scmp.ne.s32.totalorder %s39, %s40
      %p51 = scmp.eq.s32.totalorder %s31, 0
      %p52 = por %p50, %p51
      %p53 = scmp.ne.s32.totalorder %s39, %s40
      %p54 = scmp.eq.s32.totalorder %s32, 1
      %p55 = por %p53, %p54
      %p57 = scmp.ne.s32.totalorder %s40, %s56
      %p58 = scmp.eq.s32.totalorder %s32, 0
      %p59 = por %p57, %p58
      %s61 = sadd.s32 %s60, 1
      %p64 = scmp.eq.s32.totalorder %s26, 1
      %p65 = scmp.ne.s32.totalorder %s60, %s62
      %p66 = scmp.eq.s32.totalorder %s26, 0
      %p67 = por %p65, %p66
      %p68 = scmp.ne.s32.totalorder %s60, %s62
      %p69 = scmp.eq.s32.totalorder %s31, 1
      %p70 = por %p68, %p69
      %p71 = scmp.ne.s32.totalorder %s62, %s63
      %p72 = scmp.eq.s32.totalorder %s31, 0
      %p73 = por %p71, %p72
      %p74 = scmp.ne.s32.totalorder %s62, %s63
      %p75 = scmp.eq.s32.totalorder %s32, 1
      %p76 = por %p74, %p75
      %p78 = scmp.ne.s32.totalorder %s63, %s77
      %p79 = scmp.eq.s32.totalorder %s32, 0
      %p80 = por %p78, %p79
      %s82 = sadd.s32 %s81, 1
      %p85 = scmp.eq.s32.totalorder %s26, 1
      %p86 = scmp.ne.s32.totalorder %s81, %s83
      %p87 = scmp.eq.s32.totalorder %s26, 0
      %p88 = por %p86, %p87
      %p89 = scmp.ne.s32.totalorder %s81, %s83
      %p90 = scmp.eq.s32.totalorder %s31, 1
      %p91 = por %p89, %p90
      %p92 = scmp.ne.s32.totalorder %s83, %s84
      %p93 = scmp.eq.s32.totalorder %s31, 0
      %p94 = por %p92, %p93
      %p95 = scmp.ne.s32.totalorder %s83, %s84
      %p96 = scmp.eq.s32.totalorder %s32, 1
      %p97 = por %p95, %p96
      %p99 = scmp.ne.s32.totalorder %s84, %s98
      %p100 = scmp.eq.s32.totalorder %s32, 0
      %p101 = por %p99, %p100
      %s103 = sadd.s32 %s102, 1
      %p106 = scmp.eq.s32.totalorder %s26, 1
      %p107 = scmp.ne.s32.totalorder %s102, %s104
      %p108 = scmp.eq.s32.totalorder %s26, 0
      %p109 = por %p107, %p108
      %p110 = scmp.ne.s32.totalorder %s102, %s104
      %p111 = scmp.eq.s32.totalorder %s31, 1
      %p112 = por %p110, %p111
      %p113 = scmp.ne.s32.totalorder %s104, %s105
      %p114 = scmp.eq.s32.totalorder %s31, 0
      %p115 = por %p113, %p114
      %p116 = scmp.ne.s32.totalorder %s104, %s105
      %p117 = scmp.eq.s32.totalorder %s32, 1
      %p118 = por %p116, %p117
      %p120 = scmp.ne.s32.totalorder %s105, %s119
      %p121 = scmp.eq.s32.totalorder %s32, 0
      %p122 = por %p120, %p121
      %s124 = sadd.s32 %s123, 1
      %p127 = scmp.eq.s32.totalorder %s26, 1
      %p128 = scmp.ne.s32.totalorder %s123, %s125
      %p129 = scmp.eq.s32.totalorder %s26, 0
      %p130 = por %p128, %p129
      %p131 = scmp.ne.s32.totalorder %s123, %s125
      %p132 = scmp.eq.s32.totalorder %s31, 1
      %p133 = por %p131, %p132
      %p134 = scmp.ne.s32.totalorder %s125, %s126
      %p135 = scmp.eq.s32.totalorder %s31, 0
      %p136 = por %p134, %p135
      %p137 = scmp.ne.s32.totalorder %s125, %s126
      %p138 = scmp.eq.s32.totalorder %s32, 1
      %p139 = por %p137, %p138
      %p141 = scmp.ne.s32.totalorder %s126, %s140
      %p142 = scmp.eq.s32.totalorder %s32, 0
      %p143 = por %p141, %p142
      %s145 = sadd.s32 %s144, 1
      %p148 = scmp.eq.s32.totalorder %s26, 1
      %p149 = scmp.ne.s32.totalorder %s144, %s146
      %p150 = scmp.eq.s32.totalorder %s26, 0
      %p151 = por %p149, %p150
      %p152 = scmp.ne.s32.totalorder %s144, %s146
      %p153 = scmp.eq.s32.totalorder %s31, 1
      %p154 = por %p152, %p153
      %p155 = scmp.ne.s32.totalorder %s146, %s147
      %p156 = scmp.eq.s32.totalorder %s31, 0
      %p157 = por %p155, %p156
      %p158 = scmp.ne.s32.totalorder %s146, %s147
      %p159 = scmp.eq.s32.totalorder %s32, 1
      %p160 = por %p158, %p159
      %p162 = scmp.ne.s32.totalorder %s147, %s161
      %p163 = scmp.eq.s32.totalorder %s32, 0
      %p164 = por %p162, %p163
      %s166 = sadd.s32 %s165, 1
      %p169 = scmp.eq.s32.totalorder %s26, 1
      %p170 = scmp.ne.s32.totalorder %s165, %s167
      %p171 = scmp.eq.s32.totalorder %s26, 0
      %p172 = por %p170, %p171
      %p173 = scmp.ne.s32.totalorder %s165, %s167
      %p174 = scmp.eq.s32.totalorder %s31, 1
      %p175 = por %p173, %p174
      %p176 = scmp.ne.s32.totalorder %s167, %s168
      %p177 = scmp.eq.s32.totalorder %s31, 0
      %p178 = por %p176, %p177
      %p179 = scmp.ne.s32.totalorder %s167, %s168
      %p180 = scmp.eq.s32.totalorder %s32, 1
      %p181 = por %p179, %p180
      %p183 = scmp.ne.s32.totalorder %s168, %s182
      %p184 = scmp.eq.s32.totalorder %s32, 0
      %p185 = por %p183, %p184
      %s187 = sadd.s32 %s186, 1
      %p190 = scmp.eq.s32.totalorder %s26, 1
      %p191 = scmp.ne.s32.totalorder %s186, %s188
      %p192 = scmp.eq.s32.totalorder %s26, 0
      %p193 = por %p191, %p192
      %p194 = scmp.ne.s32.totalorder %s186, %s188
      %p195 = scmp.eq.s32.totalorder %s31, 1
      %p196 = por %p194, %p195
      %p197 = scmp.ne.s32.totalorder %s188, %s189
      %p198 = scmp.eq.s32.totalorder %s31, 0
      %p199 = por %p197, %p198
      %p200 = scmp.ne.s32.totalorder %s188, %s189
      %p201 = scmp.eq.s32.totalorder %s32, 1
      %p202 = por %p200, %p201
      %p204 = scmp.ne.s32.totalorder %s189, %s203
      %p205 = scmp.eq.s32.totalorder %s32, 0
      %p206 = por %p204, %p205
      %s208 = sadd.s32 %s207, 1
      %p211 = scmp.eq.s32.totalorder %s26, 1
      %p212 = scmp.ne.s32.totalorder %s207, %s209
      %p213 = scmp.eq.s32.totalorder %s26, 0
      %p214 = por %p212, %p213
      %p215 = scmp.ne.s32.totalorder %s207, %s209
      %p216 = scmp.eq.s32.totalorder %s31, 1
      %p217 = por %p215, %p216
      %p218 = scmp.ne.s32.totalorder %s209, %s210
      %p219 = scmp.eq.s32.totalorder %s31, 0
      %p220 = por %p218, %p219
      %p221 = scmp.ne.s32.totalorder %s209, %s210
      %p222 = scmp.eq.s32.totalorder %s32, 1
      %p223 = por %p221, %p222
      %p225 = scmp.ne.s32.totalorder %s210, %s224
      %p226 = scmp.eq.s32.totalorder %s32, 0
      %p227 = por %p225, %p226
      %s229 = sadd.s32 %s228, 1
      %p232 = scmp.eq.s32.totalorder %s26, 1
      %p233 = scmp.ne.s32.totalorder %s228, %s230
      %p234 = scmp.eq.s32.totalorder %s26, 0
      %p235 = por %p233, %p234
      %p236 = scmp.ne.s32.totalorder %s228, %s230
      %p237 = scmp.eq.s32.totalorder %s31, 1
      %p238 = por %p236, %p237
      %p239 = scmp.ne.s32.totalorder %s230, %s231
      %p240 = scmp.eq.s32.totalorder %s31, 0
      %p241 = por %p239, %p240
      %p242 = scmp.ne.s32.totalorder %s230, %s231
      %p243 = scmp.eq.s32.totalorder %s32, 1
      %p244 = por %p242, %p243
      %p246 = scmp.ne.s32.totalorder %s231, %s245
      %p247 = scmp.eq.s32.totalorder %s32, 0
      %p248 = por %p246, %p247
      %s250 = sadd.s32 %s249, 1
      %p253 = scmp.eq.s32.totalorder %s26, 1
      %p254 = scmp.ne.s32.totalorder %s249, %s251
      %p255 = scmp.eq.s32.totalorder %s26, 0
      %p256 = por %p254, %p255
      %p257 = scmp.ne.s32.totalorder %s249, %s251
      %p258 = scmp.eq.s32.totalorder %s31, 1
      %p259 = por %p257, %p258
      %p260 = scmp.ne.s32.totalorder %s251, %s252
      %p261 = scmp.eq.s32.totalorder %s31, 0
      %p262 = por %p260, %p261
      %p263 = scmp.ne.s32.totalorder %s251, %s252
      %p264 = scmp.eq.s32.totalorder %s32, 1
      %p265 = por %p263, %p264
      %p267 = scmp.ne.s32.totalorder %s252, %s266
      %p268 = scmp.eq.s32.totalorder %s32, 0
      %p269 = por %p267, %p268
      %s271 = sadd.s32 %s270, 1
      %p274 = scmp.eq.s32.totalorder %s26, 1
      %p275 = scmp.ne.s32.totalorder %s270, %s272
      %p276 = scmp.eq.s32.totalorder %s26, 0
      %p277 = por %p275, %p276
      %p278 = scmp.ne.s32.totalorder %s270, %s272
      %p279 = scmp.eq.s32.totalorder %s31, 1
      %p280 = por %p278, %p279
      %p281 = scmp.ne.s32.totalorder %s272, %s273
      %p282 = scmp.eq.s32.totalorder %s31, 0
      %p283 = por %p281, %p282
      %p284 = scmp.ne.s32.totalorder %s272, %s273
      %p285 = scmp.eq.s32.totalorder %s32, 1
      %p286 = por %p284, %p285
      %p288 = scmp.ne.s32.totalorder %s273, %s287
      %p289 = scmp.eq.s32.totalorder %s32, 0
      %p290 = por %p288, %p289
      %s292 = sadd.s32 %s291, 1
      %p295 = scmp.eq.s32.totalorder %s26, 1
      %p296 = scmp.ne.s32.totalorder %s291, %s293
      %p297 = scmp.eq.s32.totalorder %s26, 0
      %p298 = por %p296, %p297
      %p299 = scmp.ne.s32.totalorder %s291, %s293
      %p300 = scmp.eq.s32.totalorder %s31, 1
      %p301 = por %p299, %p300
      %p302 = scmp.ne.s32.totalorder %s293, %s294
      %p303 = scmp.eq.s32.totalorder %s31, 0
      %p304 = por %p302, %p303
      %p305 = scmp.ne.s32.totalorder %s293, %s294
      %p306 = scmp.eq.s32.totalorder %s32, 1
      %p307 = por %p305, %p306
      %p309 = scmp.ne.s32.totalorder %s294, %s308
      %p310 = scmp.eq.s32.totalorder %s32, 0
      %p311 = por %p309, %p310
      %s312 = ssub.s32 %s26, %s33
      %p313 = scmp.eq.s32.totalorder %s312, 0
      %s315 = sadd.s32 %s314, 1
      %s316 = scalar_select %p313, %s314, %s315
      %p319 = pneg %p313
      %p320 = scmp.eq.s32.totalorder %s26, 1
      %p321 = por %p319, %p320
      %p322 = scmp.ne.s32.totalorder %s314, %s317
      %p323 = scmp.eq.s32.totalorder %s26, 0
      %p324 = por %p322, %p323
      %p325 = scmp.ne.s32.totalorder %s314, %s317
      %p326 = scmp.eq.s32.totalorder %s31, 1
      %p327 = por %p325, %p326
      %p328 = scmp.ne.s32.totalorder %s317, %s318
      %p329 = scmp.eq.s32.totalorder %s31, 0
      %p330 = por %p328, %p329
      %p331 = scmp.ne.s32.totalorder %s317, %s318
      %p332 = scmp.eq.s32.totalorder %s32, 1
      %p333 = por %p331, %p332
      %p335 = scmp.ne.s32.totalorder %s318, %s334
      %p336 = scmp.eq.s32.totalorder %s32, 0
      %p337 = por %p335, %p336
      %p338 = scmp.le.s32.totalorder 1, %s26
      %p339 = scmp.lt.s32.totalorder %s26, 3
      %p340 = pnand %p338, %p339
      %p341 = pneg %p340
      // Predicated region
      $region9: #{tpu_custom_call.1} parent=5 // pred_check
        _
      $region10: #{tpu_custom_call.1} parent=5 // pred_check_branch
        %343 = sbr.rel (%p340) target = $region12
      $region11: #{tpu_custom_call.1} parent=5 // pred_region
        %s344 = ssub.s32 %s26, 1
        // Predicated region
        $region13: #{tpu_custom_call.1} parent=11 // pred_check
          %p345 = pneg %p73
        $region14: #{tpu_custom_call.1} parent=11 // pred_check_branch
          %347 = sbr.rel (%p345) target = $region16
        $region15: #{tpu_custom_call.1} parent=11 // pred_region
          %349 = vsyncadd [#allocation3], 0
          %s351 = sshll.u32 %s1, 4
          %s352 = int_to_ptr.hbm [resolvable:$true] %s351
          %s353 = sshll.u32 [#allocation2], 4
          %s354 = int_to_ptr.vmem [resolvable:$true] %s353
          %356 = dma.hbm_to_vmem [thread:$0]  %s352, 64, %s354, [#allocation3]
        $region16: #{tpu_custom_call.1} parent=11 // pred_fallthru
          _
        // Predicated region
        $region17: #{tpu_custom_call.1} parent=11 // pred_check
          %p357 = pneg %p94
        $region18: #{tpu_custom_call.1} parent=11 // pred_check_branch
          %359 = sbr.rel (%p357) target = $region20
        $region19: #{tpu_custom_call.1} parent=11 // pred_region
          _
        $region20: #{tpu_custom_call.1} parent=11 // pred_fallthru
          _
        // Predicated region
        $region21: #{tpu_custom_call.1} parent=11 // pred_check
          %p360 = pneg %p115
        $region22: #{tpu_custom_call.1} parent=11 // pred_check_branch
          %362 = sbr.rel (%p360) target = $region24
        $region23: #{tpu_custom_call.1} parent=11 // pred_region
          _
        $region24: #{tpu_custom_call.1} parent=11 // pred_fallthru
          _
        // Predicated region
        $region25: #{tpu_custom_call.1} parent=11 // pred_check
          %p363 = pneg %p136
        $region26: #{tpu_custom_call.1} parent=11 // pred_check_branch
          %365 = sbr.rel (%p363) target = $region28
        $region27: #{tpu_custom_call.1} parent=11 // pred_region
          _
        $region28: #{tpu_custom_call.1} parent=11 // pred_fallthru
          _
        // Predicated region
        $region29: #{tpu_custom_call.1} parent=11 // pred_check
          %p366 = pneg %p157
        $region30: #{tpu_custom_call.1} parent=11 // pred_check_branch
          %368 = sbr.rel (%p366) target = $region32
        $region31: #{tpu_custom_call.1} parent=11 // pred_region
          _
        $region32: #{tpu_custom_call.1} parent=11 // pred_fallthru
          _
        // Predicated region
        $region33: #{tpu_custom_call.1} parent=11 // pred_check
          %p369 = pneg %p178
        $region34: #{tpu_custom_call.1} parent=11 // pred_check_branch
          %371 = sbr.rel (%p369) target = $region36
        $region35: #{tpu_custom_call.1} parent=11 // pred_region
          %373 = vsyncadd [#allocation6], 0
          %s375 = sshll.u32 %s6, 4
          %s376 = int_to_ptr.hbm [resolvable:$true] %s375
          %s377 = sshll.u32 [#allocation5], 4
          %s378 = int_to_ptr.vmem [resolvable:$true] %s377
          %380 = dma.hbm_to_vmem [thread:$0]  %s376, 64, %s378, [#allocation6]
        $region36: #{tpu_custom_call.1} parent=11 // pred_fallthru
          _
        // Predicated region
        $region37: #{tpu_custom_call.1} parent=11 // pred_check
          %p381 = pneg %p199
        $region38: #{tpu_custom_call.1} parent=11 // pred_check_branch
          %383 = sbr.rel (%p381) target = $region40
        $region39: #{tpu_custom_call.1} parent=11 // pred_region
          %385 = vsyncadd [#allocation6], 0
          %s386 = sshll.u32 %s7, 4
          %s387 = int_to_ptr.hbm [resolvable:$true] %s386
          %s388 = sshll.u32 [#allocation7], 4
          %s389 = int_to_ptr.vmem [resolvable:$true] %s388
          %394 = dma.hbm_to_vmem [thread:$0]  %s387, 192, %s389, [#allocation6], 64, 64, 4
        $region40: #{tpu_custom_call.1} parent=11 // pred_fallthru
          _
        // Predicated region
        $region41: #{tpu_custom_call.1} parent=11 // pred_check
          %p395 = pneg %p220
        $region42: #{tpu_custom_call.1} parent=11 // pred_check_branch
          %397 = sbr.rel (%p395) target = $region44
        $region43: #{tpu_custom_call.1} parent=11 // pred_region
          %399 = vsyncadd [#allocation9], 0
          %s400 = sshll.u32 %s8, 4
          %s401 = int_to_ptr.hbm [resolvable:$true] %s400
          %s402 = sshll.u32 [#allocation8], 4
          %s403 = int_to_ptr.vmem [resolvable:$true] %s402
          %408 = dma.hbm_to_vmem [thread:$0]  %s401, 192, %s403, [#allocation9], 64, 64, 4
        $region44: #{tpu_custom_call.1} parent=11 // pred_fallthru
          _
        // Predicated region
        $region45: #{tpu_custom_call.1} parent=11 // pred_check
          %p409 = pneg %p241
        $region46: #{tpu_custom_call.1} parent=11 // pred_check_branch
          %411 = sbr.rel (%p409) target = $region48
        $region47: #{tpu_custom_call.1} parent=11 // pred_region
          %413 = vsyncadd [#allocation9], 0
          %s415 = sshll.u32 %s9, 4
          %s416 = int_to_ptr.hbm [resolvable:$true] %s415
          %s417 = sshll.u32 [#allocation10], 4
          %s418 = int_to_ptr.vmem [resolvable:$true] %s417
          %420 = dma.hbm_to_vmem [thread:$0]  %s416, 64, %s418, [#allocation9]
        $region48: #{tpu_custom_call.1} parent=11 // pred_fallthru
          _
        // Predicated region
        $region49: #{tpu_custom_call.1} parent=11 // pred_check
          %p421 = pneg %p262
        $region50: #{tpu_custom_call.1} parent=11 // pred_check_branch
          %423 = sbr.rel (%p421) target = $region52
        $region51: #{tpu_custom_call.1} parent=11 // pred_region
          _
        $region52: #{tpu_custom_call.1} parent=11 // pred_fallthru
          _
        // Predicated region
        $region53: #{tpu_custom_call.1} parent=11 // pred_check
          %p424 = pneg %p283
        $region54: #{tpu_custom_call.1} parent=11 // pred_check_branch
          %426 = sbr.rel (%p424) target = $region56
        $region55: #{tpu_custom_call.1} parent=11 // pred_region
          %428 = vsyncadd [#allocation12], 0
          %s429 = sshll.u32 %s11, 4
          %s430 = int_to_ptr.hbm [resolvable:$true] %s429
          %s431 = sshll.u32 [#allocation11], 4
          %s432 = int_to_ptr.vmem [resolvable:$true] %s431
          %437 = dma.hbm_to_vmem [thread:$0]  %s430, 192, %s432, [#allocation12], 64, 64, 4
        $region56: #{tpu_custom_call.1} parent=11 // pred_fallthru
          _
        // Predicated region
        $region57: #{tpu_custom_call.1} parent=11 // pred_check
          %p438 = pneg %p304
        $region58: #{tpu_custom_call.1} parent=11 // pred_check_branch
          %440 = sbr.rel (%p438) target = $region60
        $region59: #{tpu_custom_call.1} parent=11 // pred_region
          %442 = vsyncadd [#allocation12], 0
          %s443 = sshll.u32 %s12, 4
          %s444 = int_to_ptr.hbm [resolvable:$true] %s443
          %s445 = sshll.u32 [#allocation13], 4
          %s446 = int_to_ptr.vmem [resolvable:$true] %s445
          %451 = dma.hbm_to_vmem [thread:$0]  %s444, 512, %s446, [#allocation12], 256, 256, 16
        $region60: #{tpu_custom_call.1} parent=11 // pred_fallthru
          _
      $region12: #{tpu_custom_call.1} parent=5 // pred_fallthru
        _
      %p452 = scmp.lt.s32.totalorder %s26, 2
      // Predicated region
      $region61: #{tpu_custom_call.1} parent=5 // pred_check
        %p453 = pneg %p452
      $region62: #{tpu_custom_call.1} parent=5 // pred_check_branch
        %455 = sbr.rel (%p453) target = $region64
      $region63: #{tpu_custom_call.1} parent=5 // pred_region
        // Predicated region
        $region65: #{tpu_custom_call.1} parent=63 // pred_check
          %p456 = pneg %p46
        $region66: #{tpu_custom_call.1} parent=63 // pred_check_branch
          %458 = sbr.rel (%p456) target = $region68
        $region67: #{tpu_custom_call.1} parent=63 // pred_region
          %p459 = scmp.lt.s32.totalorder %s26, 1
          %s460 = scalar_select %p459, %s26, 1
          %s461 = smul.addr %s460, 8
          %s462 = scalar_lea.vmem %s0, %s461
        $region68: #{tpu_custom_call.1} parent=63 // pred_fallthru
          _
      $region64: #{tpu_custom_call.1} parent=5 // pred_fallthru
        _
      %p463 = scmp.le.s32.totalorder 1, %s26
      %p464 = scmp.lt.s32.totalorder %s26, 3
      %p465 = pnand %p463, %p464
      %p466 = pneg %p465
      // Predicated region
      $region69: #{tpu_custom_call.1} parent=5 // pred_check
        _
      $region70: #{tpu_custom_call.1} parent=5 // pred_check_branch
        %468 = sbr.rel (%p465) target = $region72
      $region71: #{tpu_custom_call.1} parent=5 // pred_region
        %s469 = ssub.s32 %s26, 1
        // Predicated region
        $region73: #{tpu_custom_call.1} parent=71 // pred_check
          %p470 = pneg %p73
        $region74: #{tpu_custom_call.1} parent=71 // pred_check_branch
          %472 = sbr.rel (%p470) target = $region76
        $region75: #{tpu_custom_call.1} parent=71 // pred_region
          %474 = dma.done [#allocation3], 64
        $region76: #{tpu_custom_call.1} parent=71 // pred_fallthru
          _
        // Predicated region
        $region77: #{tpu_custom_call.1} parent=71 // pred_check
          %p475 = pneg %p178
        $region78: #{tpu_custom_call.1} parent=71 // pred_check_branch
          %477 = sbr.rel (%p475) target = $region80
        $region79: #{tpu_custom_call.1} parent=71 // pred_region
          %479 = dma.done [#allocation6], 64
        $region80: #{tpu_custom_call.1} parent=71 // pred_fallthru
          _
        // Predicated region
        $region81: #{tpu_custom_call.1} parent=71 // pred_check
          %p480 = pneg %p199
        $region82: #{tpu_custom_call.1} parent=71 // pred_check_branch
          %482 = sbr.rel (%p480) target = $region84
        $region83: #{tpu_custom_call.1} parent=71 // pred_region
          %484 = dma.done [#allocation6], 192
        $region84: #{tpu_custom_call.1} parent=71 // pred_fallthru
          _
        // Predicated region
        $region85: #{tpu_custom_call.1} parent=71 // pred_check
          %p485 = pneg %p220
        $region86: #{tpu_custom_call.1} parent=71 // pred_check_branch
          %487 = sbr.rel (%p485) target = $region88
        $region87: #{tpu_custom_call.1} parent=71 // pred_region
          %489 = dma.done [#allocation9], 192
        $region88: #{tpu_custom_call.1} parent=71 // pred_fallthru
          _
        // Predicated region
        $region89: #{tpu_custom_call.1} parent=71 // pred_check
          %p490 = pneg %p241
        $region90: #{tpu_custom_call.1} parent=71 // pred_check_branch
          %492 = sbr.rel (%p490) target = $region92
        $region91: #{tpu_custom_call.1} parent=71 // pred_region
          %494 = dma.done [#allocation9], 64
        $region92: #{tpu_custom_call.1} parent=71 // pred_fallthru
          _
        // Predicated region
        $region93: #{tpu_custom_call.1} parent=71 // pred_check
          %p495 = pneg %p283
        $region94: #{tpu_custom_call.1} parent=71 // pred_check_branch
          %497 = sbr.rel (%p495) target = $region96
        $region95: #{tpu_custom_call.1} parent=71 // pred_region
          %499 = dma.done [#allocation12], 192
        $region96: #{tpu_custom_call.1} parent=71 // pred_fallthru
          _
        // Predicated region
        $region97: #{tpu_custom_call.1} parent=71 // pred_check
          %p500 = pneg %p304
        $region98: #{tpu_custom_call.1} parent=71 // pred_check_branch
          %502 = sbr.rel (%p500) target = $region100
        $region99: #{tpu_custom_call.1} parent=71 // pred_region
          %504 = dma.done [#allocation12], 512
        $region100: #{tpu_custom_call.1} parent=71 // pred_fallthru
          _
        %p505 = scmp.lt.s32.totalorder %s31, 1
        %s506 = scalar_select %p505, %s31, 1
        %s507 = smul.addr %s506, 8
        %s508 = scalar_lea.vmem %s0, %s507
        %p509 = pneg %p52
        %p510 = pneg %p49
        %p511 = pneg %p73
        %p512 = pneg %p70
        %p513 = pneg %p94
        %p514 = pneg %p91
        %p515 = pneg %p115
        %p516 = pneg %p112
        %p517 = pneg %p136
        %p518 = pneg %p133
        %p519 = pneg %p157
        %p520 = pneg %p154
        %p521 = pneg %p178
        %p522 = pneg %p175
        %p523 = pneg %p199
        %p524 = pneg %p196
        %p525 = pneg %p220
        %p526 = pneg %p217
        %p527 = pneg %p241
        %p528 = pneg %p238
        %p529 = pneg %p262
        %p530 = pneg %p259
        %p531 = pneg %p283
        %p532 = pneg %p280
        %p533 = pneg %p304
        %p534 = pneg %p301
        %p535 = pneg %p330
        %p536 = pneg %p327
        %s537 = sand.u32 %s317, 1
        %s538 = scalar_lea.sflag [#allocation4], %s537
        %s539 = sand.u32 %s317, 1
        %s540 = smul.addr %s539, 24
        %s541 = scalar_lea.vmem [#allocation14], %s540
        %p542 = scmp.lt.s32.totalorder %s31, 1
        %s543 = scalar_select %p542, %s31, 1
        %s544 = smul.addr %s543, 8
        %s545 = scalar_lea.vmem %s0, %s544
        %v547 = vld [vmem:[%s545] sm:$0xff]
        %v548 = vpack.c.bf16 %v547, %v547
        %v549 = vld [vmem:[#allocation2] sm:$0xf]
        %v550 = vld [vmem:[#allocation13] ss:$0 sm:$0xff]
        %vm551 = vcmask 64512
        %v553 = vsel %vm551, %v548, 0
        %vm555 = vcmask 1043456
        %v557 = vsel %vm555, %v549, 0
        %559 = vmatpush.bf16.msra.mxu0 0
        %560 = vmatpush.bf16.msra.mxu0 0
        %561 = vmatpush.bf16.msra.mxu0 0
        %562 = vmatpush.bf16.msra.mxu0 0
        %563 = vmatpush.bf16.msra.mxu0 0
        %564 = vmatpush.bf16.msra.mxu0 0
        %565 = vmatpush.bf16.msra.mxu0 0
        %566 = vmatpush.bf16.msra.mxu0 %v557
        %567 = vmatmul.bf16.gmra.mxu0 %v553
        %v568 = vpop.f32.mrf.mxu0
        %v569 = vadd.f32 %v550, %v568
        %v570 = vpop.f32.mrf.mxu0
        %571 = vdwg.mxu0
        %v572 = vmax.f32 %v569, 0.0
        %v573 = vpack.c.bf16 %v572, %v572
        %v574 = vld [vmem:[%s2] sm:$0xf]
        %v575 = vld [vmem:[%s2 + $0x4] sm:$0xf]
        %v576 = vld [vmem:[%s2 + $0x8] sm:$0xf]
        %v577 = vld [vmem:[%s2 + $0xc] sm:$0xf]
        %v578 = vld [vmem:[%s2 + $0x10] sm:$0xf]
        %v579 = vld [vmem:[%s2 + $0x14] sm:$0xf]
        %v580 = vld [vmem:[%s2 + $0x18] sm:$0xf]
        %v581 = vld [vmem:[%s2 + $0x1c] sm:$0xf]
        %v582 = vld [vmem:[#allocation13 + $0x1] ss:$0 sm:$0xff]
        %v591 = vunpack.c.l.b16 %v574
        %v592 = vunpack.c.l.b16 %v575
        %v593 = vunpack.c.l.b16 %v576
        %v594 = vunpack.c.l.b16 %v577
        %v595 = vunpack.c.l.b16 %v578
        %v596 = vunpack.c.l.b16 %v579
        %v597 = vunpack.c.l.b16 %v580
        %v598 = vunpack.c.l.b16 %v581
        %v599 = vpack.c.b16 %v592, %v591
        %v600 = vpack.c.b16 %v594, %v593
        %v601 = vpack.c.b16 %v596, %v595
        %v602 = vpack.c.b16 %v598, %v597
        %vm607 = vcmask 523264
        %v609 = vsel %vm607, %v573, 0
        %611 = vmatpush.bf16.msra.mxu0 0
        %612 = vmatpush.bf16.msra.mxu0 0
        %613 = vmatpush.bf16.msra.mxu0 0
        %614 = vmatpush.bf16.msra.mxu0 0
        %615 = vmatpush.bf16.msra.mxu0 %v602
        %616 = vmatpush.bf16.msra.mxu0 %v601
        %617 = vmatpush.bf16.msra.mxu0 %v600
        %618 = vmatpush.bf16.msra.mxu0 %v599
        %619 = vmatmul.bf16.gmra.mxu0 %v609
        %v620 = vpop.f32.mrf.mxu0
        %v621 = vadd.f32 %v582, %v620
        %v622 = vpop.f32.mrf.mxu0
        %623 = vdwg.mxu0
        %v624 = vmax.f32 %v621, 0.0
        %v625 = vpack.c.bf16 %v624, %v624
        %v626 = vld [vmem:[%s3] sm:$0xff]
        %v627 = vld [vmem:[%s3 + $0x8] sm:$0xff]
        %v628 = vld [vmem:[%s3 + $0x10] sm:$0xff]
        %v629 = vld [vmem:[%s3 + $0x18] sm:$0xff]
        %v630 = vld [vmem:[%s3 + $0x20] sm:$0xff]
        %v631 = vld [vmem:[%s3 + $0x28] sm:$0xff]
        %v632 = vld [vmem:[%s3 + $0x30] sm:$0xff]
        %v633 = vld [vmem:[%s3 + $0x38] sm:$0xff]
        %v634 = vld [vmem:[%s3 + $0x40] sm:$0xff]
        %v635 = vld [vmem:[%s3 + $0x48] sm:$0xff]
        %v636 = vld [vmem:[%s3 + $0x50] sm:$0xff]
        %v637 = vld [vmem:[%s3 + $0x58] sm:$0xff]
        %v638 = vld [vmem:[%s3 + $0x60] sm:$0xff]
        %v639 = vld [vmem:[%s3 + $0x68] sm:$0xff]
        %v640 = vld [vmem:[%s3 + $0x70] sm:$0xff]
        %v641 = vld [vmem:[%s3 + $0x78] sm:$0xff]
        %s642 = scalar_lea.vmem [#allocation13], 2
        %v643 = vld [vmem:[%s642] ss:$8 sm:$0x3]
        %v645 = vperm.slane %v643, 0
        %v646 = vperm.slane %v643, 1
        %v665 = vunpack.c.l.b16 %v626
        %v666 = vunpack.c.h.b16 %v626
        %v667 = vunpack.c.l.b16 %v627
        %v668 = vunpack.c.h.b16 %v627
        %v669 = vunpack.c.l.b16 %v628
        %v670 = vunpack.c.h.b16 %v628
        %v671 = vunpack.c.l.b16 %v629
        %v672 = vunpack.c.h.b16 %v629
        %v673 = vunpack.c.l.b16 %v630
        %v674 = vunpack.c.h.b16 %v630
        %v675 = vunpack.c.l.b16 %v631
        %v676 = vunpack.c.h.b16 %v631
        %v677 = vunpack.c.l.b16 %v632
        %v678 = vunpack.c.h.b16 %v632
        %v679 = vunpack.c.l.b16 %v633
        %v680 = vunpack.c.h.b16 %v633
        %v681 = vunpack.c.l.b16 %v634
        %v682 = vunpack.c.h.b16 %v634
        %v683 = vunpack.c.l.b16 %v635
        %v684 = vunpack.c.h.b16 %v635
        %v685 = vunpack.c.l.b16 %v636
        %v686 = vunpack.c.h.b16 %v636
        %v687 = vunpack.c.l.b16 %v637
        %v688 = vunpack.c.h.b16 %v637
        %v689 = vunpack.c.l.b16 %v638
        %v690 = vunpack.c.h.b16 %v638
        %v691 = vunpack.c.l.b16 %v639
        %v692 = vunpack.c.h.b16 %v639
        %v693 = vunpack.c.l.b16 %v640
        %v694 = vunpack.c.h.b16 %v640
        %v695 = vunpack.c.l.b16 %v641
        %v696 = vunpack.c.h.b16 %v641
        %v697 = vpack.c.b16 %v667, %v665
        %v698 = vpack.c.b16 %v668, %v666
        %v699 = vpack.c.b16 %v671, %v669
        %v700 = vpack.c.b16 %v672, %v670
        %v701 = vpack.c.b16 %v675, %v673
        %v702 = vpack.c.b16 %v676, %v674
        %v703 = vpack.c.b16 %v679, %v677
        %v704 = vpack.c.b16 %v680, %v678
        %v705 = vpack.c.b16 %v683, %v681
        %v706 = vpack.c.b16 %v684, %v682
        %v707 = vpack.c.b16 %v687, %v685
        %v708 = vpack.c.b16 %v688, %v686
        %v709 = vpack.c.b16 %v691, %v689
        %v710 = vpack.c.b16 %v692, %v690
        %v711 = vpack.c.b16 %v695, %v693
        %v712 = vpack.c.b16 %v696, %v694
        %729 = vmatpush.bf16.msra.mxu0 %v711
        %730 = vmatpush.bf16.msra.mxu0 %v709
        %731 = vmatpush.bf16.msra.mxu0 %v707
        %732 = vmatpush.bf16.msra.mxu0 %v705
        %733 = vmatpush.bf16.msra.mxu0 %v703
        %734 = vmatpush.bf16.msra.mxu0 %v701
        %735 = vmatpush.bf16.msra.mxu0 %v699
        %736 = vmatpush.bf16.msra.mxu0 %v697
        %737 = vmatmul.bf16.gmra.mxu0 %v625
        %v738 = vpop.f32.mrf.mxu0
        %v739 = vadd.f32 %v645, %v738
        %v740 = vpop.f32.mrf.mxu0
        %741 = vdwg.mxu0
        %742 = vmatpush.bf16.msra.mxu0 %v712
        %743 = vmatpush.bf16.msra.mxu0 %v710
        %744 = vmatpush.bf16.msra.mxu0 %v708
        %745 = vmatpush.bf16.msra.mxu0 %v706
        %746 = vmatpush.bf16.msra.mxu0 %v704
        %747 = vmatpush.bf16.msra.mxu0 %v702
        %748 = vmatpush.bf16.msra.mxu0 %v700
        %749 = vmatpush.bf16.msra.mxu0 %v698
        %750 = vmatmul.bf16.gmra.mxu0 %v625
        %v751 = vpop.f32.mrf.mxu0
        %v752 = vadd.f32 %v646, %v751
        %v753 = vpop.f32.mrf.mxu0
        %754 = vdwg.mxu0
        %v755 = vmax.f32 %v739, 0.0
        %v756 = vmax.f32 %v752, 0.0
        %v757 = vpack.c.bf16 %v755, %v755
        %v758 = vpack.c.bf16 %v756, %v756
        %v759 = vld [vmem:[%s4] sm:$0xf]
        %v760 = vld [vmem:[%s4 + $0x4] sm:$0xf]
        %v761 = vld [vmem:[%s4 + $0x8] sm:$0xf]
        %v762 = vld [vmem:[%s4 + $0xc] sm:$0xf]
        %v763 = vld [vmem:[%s4 + $0x10] sm:$0xf]
        %v764 = vld [vmem:[%s4 + $0x14] sm:$0xf]
        %v765 = vld [vmem:[%s4 + $0x18] sm:$0xf]
        %v766 = vld [vmem:[%s4 + $0x1c] sm:$0xf]
        %v767 = vld [vmem:[%s4 + $0x20] sm:$0xf]
        %v768 = vld [vmem:[%s4 + $0x24] sm:$0xf]
        %v769 = vld [vmem:[%s4 + $0x28] sm:$0xf]
        %v770 = vld [vmem:[%s4 + $0x2c] sm:$0xf]
        %v771 = vld [vmem:[%s4 + $0x30] sm:$0xf]
        %v772 = vld [vmem:[%s4 + $0x34] sm:$0xf]
        %v773 = vld [vmem:[%s4 + $0x38] sm:$0xf]
        %v774 = vld [vmem:[%s4 + $0x3c] sm:$0xf]
        %v775 = vld [vmem:[%s4 + $0x40] sm:$0xf]
        %v776 = vld [vmem:[%s4 + $0x44] sm:$0xf]
        %v777 = vld [vmem:[%s4 + $0x48] sm:$0xf]
        %v778 = vld [vmem:[%s4 + $0x4c] sm:$0xf]
        %v779 = vld [vmem:[%s4 + $0x50] sm:$0xf]
        %v780 = vld [vmem:[%s4 + $0x54] sm:$0xf]
        %v781 = vld [vmem:[%s4 + $0x58] sm:$0xf]
        %v782 = vld [vmem:[%s4 + $0x5c] sm:$0xf]
        %v783 = vld [vmem:[%s4 + $0x60] sm:$0xf]
        %v784 = vld [vmem:[%s4 + $0x64] sm:$0xf]
        %v785 = vld [vmem:[%s4 + $0x68] sm:$0xf]
        %v786 = vld [vmem:[%s4 + $0x6c] sm:$0xf]
        %v787 = vld [vmem:[%s4 + $0x70] sm:$0xf]
        %v788 = vld [vmem:[%s4 + $0x74] sm:$0xf]
        %v789 = vld [vmem:[%s4 + $0x78] sm:$0xf]
        %v790 = vld [vmem:[%s4 + $0x7c] sm:$0xf]
        %v791 = vld [vmem:[#allocation13 + $0x3] ss:$0 sm:$0xff]
        %v824 = vunpack.c.l.b16 %v759
        %v825 = vunpack.c.l.b16 %v760
        %v826 = vunpack.c.l.b16 %v761
        %v827 = vunpack.c.l.b16 %v762
        %v828 = vunpack.c.l.b16 %v763
        %v829 = vunpack.c.l.b16 %v764
        %v830 = vunpack.c.l.b16 %v765
        %v831 = vunpack.c.l.b16 %v766
        %v832 = vunpack.c.l.b16 %v767
        %v833 = vunpack.c.l.b16 %v768
        %v834 = vunpack.c.l.b16 %v769
        %v835 = vunpack.c.l.b16 %v770
        %v836 = vunpack.c.l.b16 %v771
        %v837 = vunpack.c.l.b16 %v772
        %v838 = vunpack.c.l.b16 %v773
        %v839 = vunpack.c.l.b16 %v774
        %v840 = vunpack.c.l.b16 %v775
        %v841 = vunpack.c.l.b16 %v776
        %v842 = vunpack.c.l.b16 %v777
        %v843 = vunpack.c.l.b16 %v778
        %v844 = vunpack.c.l.b16 %v779
        %v845 = vunpack.c.l.b16 %v780
        %v846 = vunpack.c.l.b16 %v781
        %v847 = vunpack.c.l.b16 %v782
        %v848 = vunpack.c.l.b16 %v783
        %v849 = vunpack.c.l.b16 %v784
        %v850 = vunpack.c.l.b16 %v785
        %v851 = vunpack.c.l.b16 %v786
        %v852 = vunpack.c.l.b16 %v787
        %v853 = vunpack.c.l.b16 %v788
        %v854 = vunpack.c.l.b16 %v789
        %v855 = vunpack.c.l.b16 %v790
        %v856 = vpack.c.b16 %v825, %v824
        %v857 = vpack.c.b16 %v827, %v826
        %v858 = vpack.c.b16 %v829, %v828
        %v859 = vpack.c.b16 %v831, %v830
        %v860 = vpack.c.b16 %v833, %v832
        %v861 = vpack.c.b16 %v835, %v834
        %v862 = vpack.c.b16 %v837, %v836
        %v863 = vpack.c.b16 %v839, %v838
        %v864 = vpack.c.b16 %v841, %v840
        %v865 = vpack.c.b16 %v843, %v842
        %v866 = vpack.c.b16 %v845, %v844
        %v867 = vpack.c.b16 %v847, %v846
        %v868 = vpack.c.b16 %v849, %v848
        %v869 = vpack.c.b16 %v851, %v850
        %v870 = vpack.c.b16 %v853, %v852
        %v871 = vpack.c.b16 %v855, %v854
        %888 = vmatpush.bf16.msra.mxu0 %v863
        %889 = vmatpush.bf16.msra.mxu0 %v862
        %890 = vmatpush.bf16.msra.mxu0 %v861
        %891 = vmatpush.bf16.msra.mxu0 %v860
        %892 = vmatpush.bf16.msra.mxu0 %v859
        %893 = vmatpush.bf16.msra.mxu0 %v858
        %894 = vmatpush.bf16.msra.mxu0 %v857
        %895 = vmatpush.bf16.msra.mxu0 %v856
        %896 = vmatmul.bf16.gmra.mxu0 %v757
        %v897 = vpop.f32.mrf.mxu0
        %v898 = vadd.f32 %v791, %v897
        %v899 = vpop.f32.mrf.mxu0
        %900 = vdwg.mxu0
        %901 = vmatpush.bf16.msra.mxu0 %v871
        %902 = vmatpush.bf16.msra.mxu0 %v870
        %903 = vmatpush.bf16.msra.mxu0 %v869
        %904 = vmatpush.bf16.msra.mxu0 %v868
        %905 = vmatpush.bf16.msra.mxu0 %v867
        %906 = vmatpush.bf16.msra.mxu0 %v866
        %907 = vmatpush.bf16.msra.mxu0 %v865
        %908 = vmatpush.bf16.msra.mxu0 %v864
        %909 = vmatmul.bf16.gmra.mxu0 %v758
        %v910 = vpop.f32.mrf.mxu0
        %v911 = vadd.f32 %v898, %v910
        %v912 = vpop.f32.mrf.mxu0
        %913 = vdwg.mxu0
        %v914 = vmax.f32 %v911, 0.0
        %v915 = vpack.c.bf16 %v914, %v914
        %v916 = vld [vmem:[%s5] sm:$0xf]
        %v917 = vld [vmem:[%s5 + $0x4] sm:$0xf]
        %v918 = vld [vmem:[%s5 + $0x8] sm:$0xf]
        %v919 = vld [vmem:[#allocation13 + $0x4] ss:$0 sm:$0xff]
        %v923 = vunpack.c.l.b16 %v916
        %v924 = vunpack.c.l.b16 %v917
        %v925 = vunpack.c.l.b16 %v918
        %v926 = vpack.c.b16 %v924, %v923
        %v927 = vpack.c.b16 %v925, %v925
        %vm929 = vcmask 195584
        %v931 = vsel %vm929, %v915, 0
        %v934 = vsel %vm555, %v927, 0
        %936 = vmatpush.bf16.msra.mxu0 0
        %937 = vmatpush.bf16.msra.mxu0 0
        %938 = vmatpush.bf16.msra.mxu0 0
        %939 = vmatpush.bf16.msra.mxu0 0
        %940 = vmatpush.bf16.msra.mxu0 0
        %941 = vmatpush.bf16.msra.mxu0 0
        %942 = vmatpush.bf16.msra.mxu0 %v934
        %943 = vmatpush.bf16.msra.mxu0 %v926
        %944 = vmatmul.bf16.gmra.mxu0 %v931
        %v945 = vpop.f32.mrf.mxu0
        %v946 = vadd.f32 %v919, %v945
        %v947 = vpop.f32.mrf.mxu0
        %948 = vdwg.mxu0
        %949 = vst.msk [vmem:[%s541] sm:$0xff] %vm929, %v946
        %v950 = vld [vmem:[#allocation5] sm:$0xf]
        %v951 = vpack.c.bf16 %v946, %v946
        %v952 = vld [vmem:[#allocation7] sm:$0xf]
        %v953 = vld [vmem:[#allocation7 + $0x4] sm:$0xf]
        %v954 = vld [vmem:[#allocation7 + $0x8] sm:$0xf]
        %v958 = vunpack.c.l.b16 %v952
        %v959 = vunpack.c.l.b16 %v953
        %v960 = vunpack.c.l.b16 %v954
        %v961 = vpack.c.b16 %v959, %v958
        %v962 = vpack.c.b16 %v960, %v960
        %v965 = vsel %vm929, %v951, 0
        %v968 = vsel %vm555, %v962, 0
        %970 = vmatpush.bf16.msra.mxu0 0
        %971 = vmatpush.bf16.msra.mxu0 0
        %972 = vmatpush.bf16.msra.mxu0 0
        %973 = vmatpush.bf16.msra.mxu0 0
        %974 = vmatpush.bf16.msra.mxu0 0
        %975 = vmatpush.bf16.msra.mxu0 0
        %976 = vmatpush.bf16.msra.mxu0 %v968
        %977 = vmatpush.bf16.msra.mxu0 %v961
        %978 = vmatmul.bf16.gmra.mxu0 %v965
        %v979 = vpop.f32.mrf.mxu0
        %v980 = vadd.f32 0.0, %v979
        %v981 = vpop.f32.mrf.mxu0
        %982 = vdwg.mxu0
        %v984 = vsel %vm555, %v950, 0
        %986 = vmatpush.bf16.msra.mxu0 0
        %987 = vmatpush.bf16.msra.mxu0 0
        %988 = vmatpush.bf16.msra.mxu0 0
        %989 = vmatpush.bf16.msra.mxu0 0
        %990 = vmatpush.bf16.msra.mxu0 0
        %991 = vmatpush.bf16.msra.mxu0 0
        %992 = vmatpush.bf16.msra.mxu0 0
        %993 = vmatpush.bf16.msra.mxu0 %v984
        %994 = vmatmul.bf16.gmra.mxu0 %v553
        %v995 = vpop.f32.mrf.mxu0
        %v996 = vadd.f32 %v980, %v995
        %v997 = vpop.f32.mrf.mxu0
        %998 = vdwg.mxu0
        %v999 = vld [vmem:[#allocation13 + $0x5] ss:$0 sm:$0xff]
        %v1000 = vadd.f32 %v996, %v999
        %v1001 = vmax.f32 %v1000, 0.0
        %v1002 = vpack.c.bf16 %v1001, %v1001
        %v1003 = vld [vmem:[#allocation8] sm:$0xf]
        %v1004 = vld [vmem:[#allocation8 + $0x4] sm:$0xf]
        %v1005 = vld [vmem:[#allocation8 + $0x8] sm:$0xf]
        %v1006 = vld [vmem:[#allocation13 + $0x6] ss:$0 sm:$0xff]
        %v1010 = vunpack.c.l.b16 %v1003
        %v1011 = vunpack.c.l.b16 %v1004
        %v1012 = vunpack.c.l.b16 %v1005
        %v1013 = vpack.c.b16 %v1011, %v1010
        %v1014 = vpack.c.b16 %v1012, %v1012
        %v1017 = vsel %vm929, %v1002, 0
        %v1020 = vsel %vm555, %v1014, 0
        %1022 = vmatpush.bf16.msra.mxu0 0
        %1023 = vmatpush.bf16.msra.mxu0 0
        %1024 = vmatpush.bf16.msra.mxu0 0
        %1025 = vmatpush.bf16.msra.mxu0 0
        %1026 = vmatpush.bf16.msra.mxu0 0
        %1027 = vmatpush.bf16.msra.mxu0 0
        %1028 = vmatpush.bf16.msra.mxu0 %v1020
        %1029 = vmatpush.bf16.msra.mxu0 %v1013
        %1030 = vmatmul.bf16.gmra.mxu0 %v1017
        %v1031 = vpop.f32.mrf.mxu0
        %v1032 = vadd.f32 %v1006, %v1031
        %v1033 = vpop.f32.mrf.mxu0
        %1034 = vdwg.mxu0
        %s1035 = scalar_lea.vmem %s541, 8 [#allocation14]
        %1036 = vst.msk [vmem:[%s1035] sm:$0xff] %vm929, %v1032
        %v1037 = vld [vmem:[#allocation10] sm:$0xf]
        %v1038 = vpack.c.bf16 %v1032, %v1032
        %v1039 = vld [vmem:[%s10] sm:$0xf]
        %v1040 = vld [vmem:[%s10 + $0x4] sm:$0xf]
        %v1041 = vld [vmem:[%s10 + $0x8] sm:$0xf]
        %v1045 = vunpack.c.l.b16 %v1039
        %v1046 = vunpack.c.l.b16 %v1040
        %v1047 = vunpack.c.l.b16 %v1041
        %v1048 = vpack.c.b16 %v1046, %v1045
        %v1049 = vpack.c.b16 %v1047, %v1047
        %v1052 = vsel %vm929, %v1038, 0
        %v1055 = vsel %vm555, %v1049, 0
        %1057 = vmatpush.bf16.msra.mxu0 0
        %1058 = vmatpush.bf16.msra.mxu0 0
        %1059 = vmatpush.bf16.msra.mxu0 0
        %1060 = vmatpush.bf16.msra.mxu0 0
        %1061 = vmatpush.bf16.msra.mxu0 0
        %1062 = vmatpush.bf16.msra.mxu0 0
        %1063 = vmatpush.bf16.msra.mxu0 %v1055
        %1064 = vmatpush.bf16.msra.mxu0 %v1048
        %1065 = vmatmul.bf16.gmra.mxu0 %v1052
        %v1066 = vpop.f32.mrf.mxu0
        %v1067 = vadd.f32 0.0, %v1066
        %v1068 = vpop.f32.mrf.mxu0
        %1069 = vdwg.mxu0
        %v1071 = vsel %vm555, %v1037, 0
        %1073 = vmatpush.bf16.msra.mxu0 0
        %1074 = vmatpush.bf16.msra.mxu0 0
        %1075 = vmatpush.bf16.msra.mxu0 0
        %1076 = vmatpush.bf16.msra.mxu0 0
        %1077 = vmatpush.bf16.msra.mxu0 0
        %1078 = vmatpush.bf16.msra.mxu0 0
        %1079 = vmatpush.bf16.msra.mxu0 0
        %1080 = vmatpush.bf16.msra.mxu0 %v1071
        %1081 = vmatmul.bf16.gmra.mxu0 %v553
        %v1082 = vpop.f32.mrf.mxu0
        %v1083 = vadd.f32 %v1067, %v1082
        %v1084 = vpop.f32.mrf.mxu0
        %1085 = vdwg.mxu0
        %v1086 = vld [vmem:[#allocation13 + $0x7] ss:$0 sm:$0xff]
        %v1087 = vadd.f32 %v1083, %v1086
        %v1088 = vmax.f32 %v1087, 0.0
        %v1089 = vpack.c.bf16 %v1088, %v1088
        %v1090 = vld [vmem:[#allocation11] sm:$0xf]
        %v1091 = vld [vmem:[#allocation11 + $0x4] sm:$0xf]
        %v1092 = vld [vmem:[#allocation11 + $0x8] sm:$0xf]
        %v1093 = vld [vmem:[#allocation13 + $0x10] ss:$0 sm:$0xff]
        %v1097 = vunpack.c.l.b16 %v1090
        %v1098 = vunpack.c.l.b16 %v1091
        %v1099 = vunpack.c.l.b16 %v1092
        %v1100 = vpack.c.b16 %v1098, %v1097
        %v1101 = vpack.c.b16 %v1099, %v1099
        %v1104 = vsel %vm929, %v1089, 0
        %v1107 = vsel %vm555, %v1101, 0
        %1109 = vmatpush.bf16.msra.mxu0 0
        %1110 = vmatpush.bf16.msra.mxu0 0
        %1111 = vmatpush.bf16.msra.mxu0 0
        %1112 = vmatpush.bf16.msra.mxu0 0
        %1113 = vmatpush.bf16.msra.mxu0 0
        %1114 = vmatpush.bf16.msra.mxu0 0
        %1115 = vmatpush.bf16.msra.mxu0 %v1107
        %1116 = vmatpush.bf16.msra.mxu0 %v1100
        %1117 = vmatmul.bf16.gmra.mxu0 %v1104
        %v1118 = vpop.f32.mrf.mxu0
        %v1119 = vadd.f32 %v1093, %v1118
        %v1120 = vpop.f32.mrf.mxu0
        %1121 = vdwg.mxu0
        %s1122 = scalar_lea.vmem %s541, 16 [#allocation14]
        %1123 = vst.msk [vmem:[%s1122] sm:$0xff] %vm929, %v1119
        %s1124 = sand.u32 %s317, 1
        %s1125 = scalar_lea.sflag [#allocation4], %s1124
        %s1126 = sand.u32 %s317, 1
        %s1127 = smul.addr %s1126, 24
        %s1128 = scalar_lea.vmem [#allocation14], %s1127
        // Predicated region
        $region101: #{tpu_custom_call.1} parent=71 // pred_check
          %p1129 = pneg %p327
        $region102: #{tpu_custom_call.1} parent=71 // pred_check_branch
          %1131 = sbr.rel (%p1129) target = $region104
        $region103: #{tpu_custom_call.1} parent=71 // pred_region
          %1133 = vsyncadd %s1125, 0
          %s1134 = smul.addr %s31, 8
          %s1135 = scalar_lea.hbm %s13, %s1134
          %s1136 = sshll.u32 %s1128, 4
          %s1137 = int_to_ptr.vmem [resolvable:$true] %s1136
          %s1138 = sshll.u32 %s1135, 4
          %s1139 = int_to_ptr.hbm [resolvable:$true] %s1138
          %1144 = dma.vmem_to_hbm [thread:$0]  %s1137, 384, %s1139, %s1125, 128, 256, 8
        $region104: #{tpu_custom_call.1} parent=71 // pred_fallthru
          _
      $region72: #{tpu_custom_call.1} parent=5 // pred_fallthru
        _
      %p1145 = scmp.le.s32.totalorder 2, %s26
      // Predicated region
      $region105: #{tpu_custom_call.1} parent=5 // pred_check
        %p1146 = pneg %p1145
      $region106: #{tpu_custom_call.1} parent=5 // pred_check_branch
        %1148 = sbr.rel (%p1146) target = $region108
      $region107: #{tpu_custom_call.1} parent=5 // pred_region
        %s1149 = ssub.s32 %s26, 2
        // Predicated region
        $region109: #{tpu_custom_call.1} parent=107 // pred_check
          %p1150 = pneg %p333
        $region110: #{tpu_custom_call.1} parent=107 // pred_check_branch
          %1152 = sbr.rel (%p1150) target = $region112
        $region111: #{tpu_custom_call.1} parent=107 // pred_region
          %s1153 = sand.u32 %s318, 1
          %s1154 = scalar_lea.sflag [#allocation4], %s1153
          %s1155 = sand.u32 %s318, 1
          %s1156 = smul.addr %s1155, 24
          %s1157 = scalar_lea.vmem [#allocation14], %s1156
          %1159 = dma.done %s1154, 384
        $region112: #{tpu_custom_call.1} parent=107 // pred_fallthru
          _
      $region108: #{tpu_custom_call.1} parent=5 // pred_fallthru
        _
    $region6: #{tpu_custom_call.1} parent=1 // loop_footer
      %s30 = sadd.s32 1, %s26
    $region7: #{tpu_custom_call.1} parent=1 // loop_footer_branch
      %25 = sbr.rel target = $region3
    $region8: #{tpu_custom_call.1} parent=1 // loop_exit
      _
    %1160 = vsyncpa [#allocation3], 1
    %s1161 = scalar_lea.sflag [#allocation3], 1
    %1162 = vsyncpa %s1161, 1
    %1163 = vsyncpa [#allocation6], 1
    %1164 = vsyncpa [#allocation9], 1
    %1165 = vsyncpa [#allocation12], 1
    %1166 = vsyncpa [#allocation4], 1
    %s1167 = scalar_lea.sflag [#allocation4], 1
    %1168 = vsyncpa %s1167, 1

</llo_original>
